<compile_context>
chip_gen: v7x
topology: tpu7x:2x2x1
jax: 0.10.0
libtpu: 0.0.40
codegen_flags: <defaults>
</compile_context>

<pallas_src>
import jax
import jax.numpy as jnp
from jax.experimental import pallas as pl
from jax.experimental.pallas import tpu as pltpu


def _round_up(v, m):
    return ((v + m - 1) // m) * m


# ----------------------------------------------------------------------------
# Tiny "module spec" mirror of the PyToyTorch Module/Sequential structure.
# Each spec carries its params (like Module.params); Sequential flattens them.
# ----------------------------------------------------------------------------
class LinearSpec:
    def __init__(self, w, b):
        # w: [in_features, out_features] (bf16), b: [1, out_features] (f32)
        self.kind = "linear"
        self.params = [w, b]


class ReLUSpec:
    def __init__(self):
        self.kind = "relu"
        self.params = []


class SequentialSpec:
    def __init__(self, *modules):
        self.modules = list(modules)
        # Sequential.params = [param for m in modules for param in m.params]
        self.params = [p for m in modules for p in m.params]
        self.kinds = [m.kind for m in modules]


# ----------------------------------------------------------------------------
# Fused Pallas kernel: applies every module in order on one (TM, ·) batch tile.
# ----------------------------------------------------------------------------
def make_sequential_kernel(kinds):
    def kernel(x_ref, *refs):
        out_ref = refs[-1]
        param_refs = refs[:-1]
        h = x_ref[...]                      # bf16 activations streamed from HBM
        idx = 0
        for kind in kinds:
            if kind == "linear":
                w = param_refs[idx][...]          # bf16 weight, VMEM-resident
                b = param_refs[idx + 1][...]      # f32 bias
                idx += 2
                # bf16 x bf16 on the MXU, f32 accumulation; bias add fused
                # after the MXU pop as a single VPU add (free under MXU slack).
                h = jnp.dot(h.astype(jnp.bfloat16), w,
                            preferred_element_type=jnp.float32) + b
            elif kind == "relu":
                # ReLU, then immediately narrow to bf16: it is the next
                # matmul's operand dtype anyway, and the half-width live tile
                # halves vreg pressure / spill-store traffic (matters most on
                # v5e's single vector-store slot).
                h = jnp.maximum(h, 0.0).astype(jnp.bfloat16)
            else:
                # TODO(synk): only Linear/ReLU sub-modules are lowered here.
                raise NotImplementedError(kind)
        out_ref[...] = h.astype(out_ref.dtype)

    return kernel


def sequential_forward(seq: SequentialSpec, x: jnp.ndarray, *, tm: int = 512):
    batch, in_f = x.shape

    # Infer output feature width from the last Linear in the stack.
    out_features = in_f
    widest = in_f
    for m in seq.modules:
        if m.kind == "linear":
            out_features = m.params[0].shape[1]
            widest = max(widest, out_features)

    # Batch tile: explicit multiple of 8 (sublane constraint), never wider
    # than the (rounded-up) batch.
    tm = max(8, min(_round_up(tm, 8), _round_up(batch, 8)))
    num_steps = pl.cdiv(batch, tm)
    # v7x megacore: with ("parallel",) the batch axis shards across 2 TCs.
    # Give each core >=2 steps (>=4 total) to pipeline when the batch allows
    # it, but never shrink below 256 rows/tile (per-step overhead dominates).
    if 1 < num_steps < 4:
        alt = max(256, _round_up(pl.cdiv(batch, 4), 8))
        if alt < tm:
            tm = alt
            num_steps = pl.cdiv(batch, tm)
    grid = (num_steps,)

    operands = [x] + seq.params

    # Generation-aware VMEM capacity (128 MiB v5e/v6e, 64 MiB v7x).
    try:
        vmem_cap = int(getattr(pltpu.get_tpu_info(), "vmem_capacity_bytes",
                               64 * 1024 * 1024))
    except Exception:  # pragma: no cover - conservative fallback
        vmem_cap = 64 * 1024 * 1024

    param_bytes = sum(p.size * p.dtype.itemsize for p in seq.params)
    # If the resident parameter set is a large fraction of VMEM, drop its
    # (pointless) double-buffer allocation: the blocks never change across
    # grid steps, so a single buffer suffices.
    single_buffer_params = (2 * param_bytes) > (vmem_cap // 4)
    # TODO(synk): if a single Linear's weights alone cannot fit VMEM (e.g.
    # 4096x4096 layers on v7x), tile that layer over N (or K with an f32
    # accumulator scratch) instead of keeping every layer resident.

    # Activation tile walks the batch; params use constant index_maps so they
    # stay VMEM-resident across grid iterations (no per-step re-DMA).
    # (If profiling ever shows exposed activation DMA at large tm, bump this
    # x-tile spec to pipeline_mode=pl.Buffered(3).)
    in_specs = [pl.BlockSpec((tm, in_f), lambda i: (i, 0))]
    for p in seq.params:
        kwargs = {}
        if single_buffer_params:
            kwargs["pipeline_mode"] = pl.Buffered(1)
        in_specs.append(
            pl.BlockSpec(p.shape, lambda i, _nd=p.ndim: (0,) * _nd, **kwargs)
        )
    out_spec = pl.BlockSpec((tm, out_features), lambda i: (i, 0))

    # Cost estimate: matmul flops + HBM traffic (activations in/out + params).
    flops = 0
    for m in seq.modules:
        if m.kind == "linear":
            k, n = m.params[0].shape
            flops += 2 * batch * k * n
    bytes_accessed = (x.size * x.dtype.itemsize
                      + batch * out_features * x.dtype.itemsize
                      + param_bytes)
    cost = pl.CostEstimate(flops=flops, transcendentals=0,
                           bytes_accessed=bytes_accessed)

    # VMEM budget from the actual working set: double-buffered streamed tiles
    # + resident params + one f32 intermediate tile, with headroom, capped
    # well inside the generation's physical VMEM.
    act_bytes = 2 * tm * (in_f + out_features) * x.dtype.itemsize
    inter_bytes = tm * widest * 4
    param_buf = 1 if single_buffer_params else 2
    needed = act_bytes + inter_bytes + param_buf * param_bytes
    vmem_limit = max(16 * 1024 * 1024,
                     min(int(0.75 * vmem_cap), 2 * needed))
    vmem_limit = min(max(vmem_limit, needed + (2 << 20)), vmem_cap)

    return pl.pallas_call(
        make_sequential_kernel(seq.kinds),
        out_shape=jax.ShapeDtypeStruct((batch, out_features), x.dtype),
        grid=grid,
        in_specs=in_specs,
        out_specs=out_spec,
        compiler_params=pltpu.CompilerParams(
            dimension_semantics=("parallel",),   # batch tiles are independent
            vmem_limit_bytes=vmem_limit,
        ),
        cost_estimate=cost,
    )(*operands)


# Pure-JAX reference of Sequential.forward (same bf16-operand / f32-accum math)
def sequential_ref(seq: SequentialSpec, x):
    h = x
    for m in seq.modules:
        if m.kind == "linear":
            w, b = m.params
            h = jnp.dot(h.astype(jnp.bfloat16), w,
                        preferred_element_type=jnp.float32) + b
        elif m.kind == "relu":
            h = jnp.maximum(h, 0.0).astype(jnp.bfloat16)
    return h.astype(x.dtype)


if __name__ == "__main__":
    key = jax.random.PRNGKey(0)
    k_x, k_w1, k_b1, k_w2, k_b2 = jax.random.split(key, 5)

    # 256-wide features (v6e/v7x 2x256x256 MXU friendly, lane-dense stores);
    # batch=2048 with tm=512 -> 4 grid steps (>=2 per TensorCore on v7x).
    batch, in_f, hid, out_f = 2048, 256, 256, 256
    x = jax.random.normal(k_x, (batch, in_f),
                          dtype=jnp.float32).astype(jnp.bfloat16)

    # Weights stored in bf16 (MXU-native, halves HBM/VMEM bytes); biases f32.
    w1 = (jax.random.normal(k_w1, (in_f, hid), dtype=jnp.float32) * 0.06
          ).astype(jnp.bfloat16)
    b1 = jax.random.normal(k_b1, (1, hid), dtype=jnp.float32) * 0.1
    w2 = (jax.random.normal(k_w2, (hid, out_f), dtype=jnp.float32) * 0.06
          ).astype(jnp.bfloat16)
    b2 = jax.random.normal(k_b2, (1, out_f), dtype=jnp.float32) * 0.1

    seq = SequentialSpec(
        LinearSpec(w1, b1),
        ReLUSpec(),
        LinearSpec(w2, b2),
        ReLUSpec(),
    )

    y = sequential_forward(seq, x, tm=512)
    y = jax.block_until_ready(y)

    y_ref = sequential_ref(seq, x)
    assert y.shape == (batch, out_f), y.shape
    assert jnp.allclose(y.astype(jnp.float32), y_ref.astype(jnp.float32),
                        atol=3e-2, rtol=3e-2), "mismatch vs reference"

    print("KERNEL_OK")
</pallas_src>

<mosaic_0001>
module attributes {stable_mosaic.version = 11 : i64} {
  func.func @kernel(%arg0: i32, %arg1: memref<512x256xbf16, #tpu.memory_space<vmem>>, %arg2: memref<256x256xbf16, #tpu.memory_space<vmem>>, %arg3: memref<1x256xf32, #tpu.memory_space<vmem>>, %arg4: memref<256x256xbf16, #tpu.memory_space<vmem>>, %arg5: memref<1x256xf32, #tpu.memory_space<vmem>>, %arg6: memref<512x256xbf16, #tpu.memory_space<vmem>>) attributes {dimension_semantics = [#tpu.dimension_semantics<parallel>], iteration_bounds = array<i64: 4>, scalar_prefetch = 0 : i64, scratch_operands = 0 : i64, tpu.core_type = #tpu.core_type<tc>, window_params = [{transform_indices = @transform_0, window_bounds = array<i64: 512, 256>}, {pipeline_mode = #tpu.pipeline_mode<synchronous>, transform_indices = @transform_1, window_bounds = array<i64: 256, 256>}, {pipeline_mode = #tpu.pipeline_mode<synchronous>, transform_indices = @transform_2, window_bounds = array<i64: 1, 256>}, {pipeline_mode = #tpu.pipeline_mode<synchronous>, transform_indices = @transform_3, window_bounds = array<i64: 256, 256>}, {pipeline_mode = #tpu.pipeline_mode<synchronous>, transform_indices = @transform_4, window_bounds = array<i64: 1, 256>}, {transform_indices = @transform_5, window_bounds = array<i64: 512, 256>}]} {
    %c0 = arith.constant 0 : index
    %c0_0 = arith.constant 0 : index
    %0 = vector.load %arg1[%c0, %c0_0] : memref<512x256xbf16, #tpu.memory_space<vmem>>, vector<512x256xbf16>
    %c0_1 = arith.constant 0 : index
    %c0_2 = arith.constant 0 : index
    %1 = vector.load %arg2[%c0_1, %c0_2] : memref<256x256xbf16, #tpu.memory_space<vmem>>, vector<256x256xbf16>
    %c0_3 = arith.constant 0 : index
    %c0_4 = arith.constant 0 : index
    %2 = vector.load %arg3[%c0_3, %c0_4] : memref<1x256xf32, #tpu.memory_space<vmem>>, vector<1x256xf32>
    %cst = arith.constant dense<0.000000e+00> : vector<512x256xf32>
    %3 = tpu.matmul %0, %1, %cst {dimension_numbers = #tpu.dot_dimension_numbers<[1], [0], [0], [1], [0, 0, 1, 1], [], []>} : vector<512x256xbf16>, vector<256x256xbf16>, vector<512x256xf32> -> vector<512x256xf32>
    %4 = vector.broadcast %2 : vector<1x256xf32> to vector<512x256xf32>
    %5 = arith.addf %3, %4 : vector<512x256xf32>
    %cst_5 = arith.constant 0.000000e+00 : f32
    %6 = vector.broadcast %cst_5 : f32 to vector<512x256xf32>
    %7 = arith.maximumf %5, %6 : vector<512x256xf32>
    %8 = arith.truncf %7 : vector<512x256xf32> to vector<512x256xbf16>
    %c0_6 = arith.constant 0 : index
    %c0_7 = arith.constant 0 : index
    %9 = vector.load %arg4[%c0_6, %c0_7] : memref<256x256xbf16, #tpu.memory_space<vmem>>, vector<256x256xbf16>
    %c0_8 = arith.constant 0 : index
    %c0_9 = arith.constant 0 : index
    %10 = vector.load %arg5[%c0_8, %c0_9] : memref<1x256xf32, #tpu.memory_space<vmem>>, vector<1x256xf32>
    %cst_10 = arith.constant dense<0.000000e+00> : vector<512x256xf32>
    %11 = tpu.matmul %8, %9, %cst_10 {dimension_numbers = #tpu.dot_dimension_numbers<[1], [0], [0], [1], [0, 0, 1, 1], [], []>} : vector<512x256xbf16>, vector<256x256xbf16>, vector<512x256xf32> -> vector<512x256xf32>
    %12 = vector.broadcast %10 : vector<1x256xf32> to vector<512x256xf32>
    %13 = arith.addf %11, %12 : vector<512x256xf32>
    %cst_11 = arith.constant 0.000000e+00 : f32
    %14 = vector.broadcast %cst_11 : f32 to vector<512x256xf32>
    %15 = arith.maximumf %13, %14 : vector<512x256xf32>
    %16 = arith.truncf %15 : vector<512x256xf32> to vector<512x256xbf16>
    %c0_12 = arith.constant 0 : index
    %c0_13 = arith.constant 0 : index
    %17 = vector.load %arg6[%c0_12, %c0_13] : memref<512x256xbf16, #tpu.memory_space<vmem>>, vector<512x256xbf16>
    tpu.vector_store %arg6[%c0_12, %c0_13], %16 {strides = array<i32>} : memref<512x256xbf16, #tpu.memory_space<vmem>>, vector<512x256xbf16>,
    return
  }
  func.func @transform_0(%arg0: i32) -> (i32, i32) {
    %c0_i32 = arith.constant 0 : i32
    %c0_i32_0 = arith.constant 0 : i32
    return %arg0, %c0_i32 : i32, i32
  }
  func.func @transform_1(%arg0: i32) -> (i32, i32) {
    %c0_i32 = arith.constant 0 : i32
    %c0_i32_0 = arith.constant 0 : i32
    %c0_i32_1 = arith.constant 0 : i32
    return %c0_i32, %c0_i32_0 : i32, i32
  }
  func.func @transform_2(%arg0: i32) -> (i32, i32) {
    %c0_i32 = arith.constant 0 : i32
    %c0_i32_0 = arith.constant 0 : i32
    %c0_i32_1 = arith.constant 0 : i32
    return %c0_i32, %c0_i32_0 : i32, i32
  }
  func.func @transform_3(%arg0: i32) -> (i32, i32) {
    %c0_i32 = arith.constant 0 : i32
    %c0_i32_0 = arith.constant 0 : i32
    %c0_i32_1 = arith.constant 0 : i32
    return %c0_i32, %c0_i32_0 : i32, i32
  }
  func.func @transform_4(%arg0: i32) -> (i32, i32) {
    %c0_i32 = arith.constant 0 : i32
    %c0_i32_0 = arith.constant 0 : i32
    %c0_i32_1 = arith.constant 0 : i32
    return %c0_i32, %c0_i32_0 : i32, i32
  }
  func.func @transform_5(%arg0: i32) -> (i32, i32) {
    %c0_i32 = arith.constant 0 : i32
    %c0_i32_0 = arith.constant 0 : i32
    return %arg0, %c0_i32 : i32, i32
  }
}

</mosaic_0001>

<llo_original>
// kernel: tpu_custom_call.1
$region0: #{tpu_custom_call.1}
  #allocation0 [shape = 'u32[]', space=smem, size = 0x4, offset = 0x4, fixed_abs, tag = 'smem constant byte address 0x4 - core index']
  #allocation1 [shape = 'u32[144,128]{1,0:T(1,128)}', space=vmem, size = 0x12000, scoped, tag = 'internal scratch']
  %s0 = inlined_call_operand.hbm [shape: bf16[2048,256], index: 0, kind: input, shape index: {}]
  %s1 = inlined_call_operand.hbm [shape: bf16[256,256], index: 1, kind: input, shape index: {}]
  %s2 = inlined_call_operand.vmem [shape: f32[1,256], index: 2, kind: input, shape index: {}]
  %s3 = inlined_call_operand.hbm [shape: bf16[256,256], index: 3, kind: input, shape index: {}]
  %s4 = inlined_call_operand.vmem [shape: f32[1,256], index: 4, kind: input, shape index: {}]
  %s5 = inlined_call_operand.hbm [shape: bf16[2048,256], index: 5, kind: output, shape index: {}]
  %s6 = sld [smem:[#allocation0]]
  $region65: #{tpu_custom_call.1} parent=0
    _
  %s8 = ssub.s32 1, %s6
  %s9 = scalar_select 0, %s8, %s6
  $region1: #{tpu_custom_call.1} parent=0
    #allocation2 [shape = 'u8[524288]{0}', space=vmem, size = 0x80000, scoped, tag = 'input window, operand 0']
    #allocation3 [shape = 's32[2]{0}', space=sflag, size = 0x8, scoped, tag = 'scoped memory for tpu_custom_call.1']
    #allocation4 [shape = 's32[2]{0}', space=sflag, size = 0x8, scoped, tag = 'scoped memory for tpu_custom_call.1']
    #allocation5 [shape = 'u8[131072]{0}', space=vmem, size = 0x20000, scoped, tag = 'input window, operand 1, single buffered']
    #allocation6 [shape = 's32[1]{0}', space=sflag, size = 0x4, scoped, tag = 'scoped memory for tpu_custom_call.1']
    #allocation7 [shape = 'u8[131072]{0}', space=vmem, size = 0x20000, scoped, tag = 'input window, operand 3, single buffered']
    #allocation8 [shape = 'u8[524288]{0}', space=vmem, size = 0x80000, scoped, tag = 'output window, operand 0']
    %10 = vsyncpa [#allocation3], 0
    %s11 = scalar_lea.sflag [#allocation3], 1
    %12 = vsyncpa %s11, 0
    %13 = vsyncpa [#allocation6], 0
    %14 = vsyncpa [#allocation4], 0
    %s15 = scalar_lea.sflag [#allocation4], 1
    %16 = vsyncpa %s15, 0
    loop: start=0, step=1, limit=6
    $region2: #{tpu_custom_call.1} parent=1 // loop_pre_header
      _
    $region3: #{tpu_custom_call.1} parent=1 // loop_header
      %s18 = sphi 0, %s22
      %p19 = scmp.ge.s32.totalorder %s18, 6
      %s28 = sphi 0, %s30
      %s31 = sphi 0, %s28
      %s32 = sphi 0, %s31
      %s48 = sphi 0, %s32
      %s52 = sphi 0, %s52
      %s54 = sphi 0, %s52
      %s55 = sphi 0, %s54
      %s69 = sphi 0, %s55
      %s73 = sphi 0, %s73
      %s75 = sphi 0, %s73
      %s76 = sphi 0, %s75
      %s90 = sphi 0, %s76
      %s94 = sphi 0, %s94
      %s96 = sphi 0, %s94
      %s97 = sphi 0, %s96
      %s111 = sphi 0, %s97
      %s115 = sphi 0, %s115
      %s117 = sphi 0, %s115
      %s118 = sphi 0, %s117
      %s132 = sphi 0, %s118
      %s138 = sphi 0, %s140
      %s141 = sphi 0, %s138
      %s142 = sphi 0, %s141
      %s158 = sphi 0, %s142
    $region4: #{tpu_custom_call.1} parent=1 // loop_header_branch
      %21 = sbr.rel (%p19) target = $region8
    $region5: #{tpu_custom_call.1} parent=1 // loop_body
      %s23 = ssub.s32 %s18, 1
      %s24 = ssub.s32 %s18, 2
      %s25 = sadd.s32 %s18, 1
      %s26 = ssub.s32 %s18, %s25
      %p27 = scmp.eq.s32.totalorder %s26, 0
      %s29 = sadd.s32 %s28, 1
      %s30 = scalar_select %p27, %s28, %s29
      %p33 = pneg %p27
      %p34 = scmp.eq.s32.totalorder %s18, 3
      %p35 = por %p33, %p34
      %p36 = scmp.ne.s32.totalorder %s28, %s31
      %p37 = scmp.eq.s32.totalorder %s18, 0
      %p38 = por %p36, %p37
      %p39 = scmp.ne.s32.totalorder %s28, %s31
      %p40 = scmp.eq.s32.totalorder %s23, 3
      %p41 = por %p39, %p40
      %p42 = scmp.ne.s32.totalorder %s31, %s32
      %p43 = scmp.eq.s32.totalorder %s23, 0
      %p44 = por %p42, %p43
      %p45 = scmp.ne.s32.totalorder %s31, %s32
      %p46 = scmp.eq.s32.totalorder %s24, 3
      %p47 = por %p45, %p46
      %p49 = scmp.ne.s32.totalorder %s32, %s48
      %p50 = scmp.eq.s32.totalorder %s24, 0
      %p51 = por %p49, %p50
      %s53 = sadd.s32 %s52, 1
      %p56 = scmp.eq.s32.totalorder %s18, 3
      %p57 = scmp.ne.s32.totalorder %s52, %s54
      %p58 = scmp.eq.s32.totalorder %s18, 0
      %p59 = por %p57, %p58
      %p60 = scmp.ne.s32.totalorder %s52, %s54
      %p61 = scmp.eq.s32.totalorder %s23, 3
      %p62 = por %p60, %p61
      %p63 = scmp.ne.s32.totalorder %s54, %s55
      %p64 = scmp.eq.s32.totalorder %s23, 0
      %p65 = por %p63, %p64
      %p66 = scmp.ne.s32.totalorder %s54, %s55
      %p67 = scmp.eq.s32.totalorder %s24, 3
      %p68 = por %p66, %p67
      %p70 = scmp.ne.s32.totalorder %s55, %s69
      %p71 = scmp.eq.s32.totalorder %s24, 0
      %p72 = por %p70, %p71
      %s74 = sadd.s32 %s73, 1
      %p77 = scmp.eq.s32.totalorder %s18, 3
      %p78 = scmp.ne.s32.totalorder %s73, %s75
      %p79 = scmp.eq.s32.totalorder %s18, 0
      %p80 = por %p78, %p79
      %p81 = scmp.ne.s32.totalorder %s73, %s75
      %p82 = scmp.eq.s32.totalorder %s23, 3
      %p83 = por %p81, %p82
      %p84 = scmp.ne.s32.totalorder %s75, %s76
      %p85 = scmp.eq.s32.totalorder %s23, 0
      %p86 = por %p84, %p85
      %p87 = scmp.ne.s32.totalorder %s75, %s76
      %p88 = scmp.eq.s32.totalorder %s24, 3
      %p89 = por %p87, %p88
      %p91 = scmp.ne.s32.totalorder %s76, %s90
      %p92 = scmp.eq.s32.totalorder %s24, 0
      %p93 = por %p91, %p92
      %s95 = sadd.s32 %s94, 1
      %p98 = scmp.eq.s32.totalorder %s18, 3
      %p99 = scmp.ne.s32.totalorder %s94, %s96
      %p100 = scmp.eq.s32.totalorder %s18, 0
      %p101 = por %p99, %p100
      %p102 = scmp.ne.s32.totalorder %s94, %s96
      %p103 = scmp.eq.s32.totalorder %s23, 3
      %p104 = por %p102, %p103
      %p105 = scmp.ne.s32.totalorder %s96, %s97
      %p106 = scmp.eq.s32.totalorder %s23, 0
      %p107 = por %p105, %p106
      %p108 = scmp.ne.s32.totalorder %s96, %s97
      %p109 = scmp.eq.s32.totalorder %s24, 3
      %p110 = por %p108, %p109
      %p112 = scmp.ne.s32.totalorder %s97, %s111
      %p113 = scmp.eq.s32.totalorder %s24, 0
      %p114 = por %p112, %p113
      %s116 = sadd.s32 %s115, 1
      %p119 = scmp.eq.s32.totalorder %s18, 3
      %p120 = scmp.ne.s32.totalorder %s115, %s117
      %p121 = scmp.eq.s32.totalorder %s18, 0
      %p122 = por %p120, %p121
      %p123 = scmp.ne.s32.totalorder %s115, %s117
      %p124 = scmp.eq.s32.totalorder %s23, 3
      %p125 = por %p123, %p124
      %p126 = scmp.ne.s32.totalorder %s117, %s118
      %p127 = scmp.eq.s32.totalorder %s23, 0
      %p128 = por %p126, %p127
      %p129 = scmp.ne.s32.totalorder %s117, %s118
      %p130 = scmp.eq.s32.totalorder %s24, 3
      %p131 = por %p129, %p130
      %p133 = scmp.ne.s32.totalorder %s118, %s132
      %p134 = scmp.eq.s32.totalorder %s24, 0
      %p135 = por %p133, %p134
      %s136 = ssub.s32 %s18, %s25
      %p137 = scmp.eq.s32.totalorder %s136, 0
      %s139 = sadd.s32 %s138, 1
      %s140 = scalar_select %p137, %s138, %s139
      %p143 = pneg %p137
      %p144 = scmp.eq.s32.totalorder %s18, 3
      %p145 = por %p143, %p144
      %p146 = scmp.ne.s32.totalorder %s138, %s141
      %p147 = scmp.eq.s32.totalorder %s18, 0
      %p148 = por %p146, %p147
      %p149 = scmp.ne.s32.totalorder %s138, %s141
      %p150 = scmp.eq.s32.totalorder %s23, 3
      %p151 = por %p149, %p150
      %p152 = scmp.ne.s32.totalorder %s141, %s142
      %p153 = scmp.eq.s32.totalorder %s23, 0
      %p154 = por %p152, %p153
      %p155 = scmp.ne.s32.totalorder %s141, %s142
      %p156 = scmp.eq.s32.totalorder %s24, 3
      %p157 = por %p155, %p156
      %p159 = scmp.ne.s32.totalorder %s142, %s158
      %p160 = scmp.eq.s32.totalorder %s24, 0
      %p161 = por %p159, %p160
      %p162 = scmp.le.s32.totalorder 1, %s18
      %p163 = scmp.lt.s32.totalorder %s18, 5
      %p164 = pnand %p162, %p163
      %p165 = pneg %p164
      // Predicated region
      $region9: #{tpu_custom_call.1} parent=5 // pred_check
        _
      $region10: #{tpu_custom_call.1} parent=5 // pred_check_branch
        %167 = sbr.rel (%p164) target = $region12
      $region11: #{tpu_custom_call.1} parent=5 // pred_region
        %s168 = ssub.s32 %s18, 1
        // Predicated region
        $region13: #{tpu_custom_call.1} parent=11 // pred_check
          %p169 = pneg %p65
        $region14: #{tpu_custom_call.1} parent=11 // pred_check_branch
          %171 = sbr.rel (%p169) target = $region16
        $region15: #{tpu_custom_call.1} parent=11 // pred_region
          %s173 = ssub.s32 4096, 4096
          %174 = vsyncadd [#allocation6], %s173
          %s175 = sshll.u32 [#allocation5], 4
          %s176 = int_to_ptr.vmem [resolvable:$true] %s175
          %181 = dma.hbm_to_vmem [thread:$0]  %s1, 4096, %s176, [#allocation6], 128, 128, 8
        $region16: #{tpu_custom_call.1} parent=11 // pred_fallthru
          _
        // Predicated region
        $region17: #{tpu_custom_call.1} parent=11 // pred_check
          %p182 = pneg %p86
        $region18: #{tpu_custom_call.1} parent=11 // pred_check_branch
          %184 = sbr.rel (%p182) target = $region20
        $region19: #{tpu_custom_call.1} parent=11 // pred_region
          _
        $region20: #{tpu_custom_call.1} parent=11 // pred_fallthru
          _
        // Predicated region
        $region21: #{tpu_custom_call.1} parent=11 // pred_check
          %p185 = pneg %p107
        $region22: #{tpu_custom_call.1} parent=11 // pred_check_branch
          %187 = sbr.rel (%p185) target = $region24
        $region23: #{tpu_custom_call.1} parent=11 // pred_region
          %s189 = ssub.s32 4096, 4096
          %190 = vsyncadd [#allocation6], %s189
          %s191 = sshll.u32 [#allocation7], 4
          %s192 = int_to_ptr.vmem [resolvable:$true] %s191
          %197 = dma.hbm_to_vmem [thread:$0]  %s3, 4096, %s192, [#allocation6], 128, 128, 8
        $region24: #{tpu_custom_call.1} parent=11 // pred_fallthru
          _
        // Predicated region
        $region25: #{tpu_custom_call.1} parent=11 // pred_check
          %p198 = pneg %p128
        $region26: #{tpu_custom_call.1} parent=11 // pred_check_branch
          %200 = sbr.rel (%p198) target = $region28
        $region27: #{tpu_custom_call.1} parent=11 // pred_region
          _
        $region28: #{tpu_custom_call.1} parent=11 // pred_fallthru
          _
      $region12: #{tpu_custom_call.1} parent=5 // pred_fallthru
        _
      %p201 = scmp.lt.s32.totalorder %s18, 4
      // Predicated region
      $region29: #{tpu_custom_call.1} parent=5 // pred_check
        %p202 = pneg %p201
      $region30: #{tpu_custom_call.1} parent=5 // pred_check_branch
        %204 = sbr.rel (%p202) target = $region32
      $region31: #{tpu_custom_call.1} parent=5 // pred_region
        // Predicated region
        $region33: #{tpu_custom_call.1} parent=31 // pred_check
          %p205 = pneg %p38
        $region34: #{tpu_custom_call.1} parent=31 // pred_check_branch
          %207 = sbr.rel (%p205) target = $region36
        $region35: #{tpu_custom_call.1} parent=31 // pred_region
          %s208 = sand.u32 %s28, 1
          %s209 = scalar_lea.sflag [#allocation3], %s208
          %s210 = sand.u32 %s28, 1
          %s211 = smul.addr %s210, 512
          %s212 = scalar_lea.vmem [#allocation2], %s211
          %s213 = smul.u32 64, %s18
          %s215 = ssub.s32 8192, 8192
          %216 = vsyncadd %s209, %s215
          %s217 = smul.addr %s213, 2
          %s218 = smul.addr %s217, 64
          %s219 = scalar_lea.hbm %s0, %s218
          %s220 = sshll.u32 %s212, 4
          %s221 = int_to_ptr.vmem [resolvable:$true] %s220
          %226 = dma.hbm_to_vmem [thread:$0]  %s219, 8192, %s221, %s209, 128, 128, 8
        $region36: #{tpu_custom_call.1} parent=31 // pred_fallthru
          _
      $region32: #{tpu_custom_call.1} parent=5 // pred_fallthru
        _
      %p227 = scmp.le.s32.totalorder 1, %s18
      %p228 = scmp.lt.s32.totalorder %s18, 5
      %p229 = pnand %p227, %p228
      %p230 = pneg %p229
      // Predicated region
      $region37: #{tpu_custom_call.1} parent=5 // pred_check
        _
      $region38: #{tpu_custom_call.1} parent=5 // pred_check_branch
        %232 = sbr.rel (%p229) target = $region40
      $region39: #{tpu_custom_call.1} parent=5 // pred_region
        %s233 = ssub.s32 %s18, 1
        %s234 = sand.u32 %s31, 1
        %s235 = scalar_lea.sflag [#allocation3], %s234
        %s236 = sand.u32 %s31, 1
        %s237 = smul.addr %s236, 512
        %s238 = scalar_lea.vmem [#allocation2], %s237
        // Predicated region
        $region41: #{tpu_custom_call.1} parent=39 // pred_check
          %p239 = pneg %p44
        $region42: #{tpu_custom_call.1} parent=39 // pred_check_branch
          %241 = sbr.rel (%p239) target = $region44
        $region43: #{tpu_custom_call.1} parent=39 // pred_region
          %242 = dma.done %s235, 8192
        $region44: #{tpu_custom_call.1} parent=39 // pred_fallthru
          _
        // Predicated region
        $region45: #{tpu_custom_call.1} parent=39 // pred_check
          %p243 = pneg %p65
        $region46: #{tpu_custom_call.1} parent=39 // pred_check_branch
          %245 = sbr.rel (%p243) target = $region48
        $region47: #{tpu_custom_call.1} parent=39 // pred_region
          %246 = dma.done [#allocation6], 4096
        $region48: #{tpu_custom_call.1} parent=39 // pred_fallthru
          _
        // Predicated region
        $region49: #{tpu_custom_call.1} parent=39 // pred_check
          %p247 = pneg %p107
        $region50: #{tpu_custom_call.1} parent=39 // pred_check_branch
          %249 = sbr.rel (%p247) target = $region52
        $region51: #{tpu_custom_call.1} parent=39 // pred_region
          %250 = dma.done [#allocation6], 4096
        $region52: #{tpu_custom_call.1} parent=39 // pred_fallthru
          _
        %s251 = sand.u32 %s31, 1
        %s252 = scalar_lea.sflag [#allocation3], %s251
        %s253 = sand.u32 %s31, 1
        %s254 = smul.addr %s253, 512
        %s255 = scalar_lea.vmem [#allocation2], %s254
        %p256 = pneg %p44
        %p257 = pneg %p41
        %p258 = pneg %p65
        %p259 = pneg %p62
        %p260 = pneg %p86
        %p261 = pneg %p83
        %p262 = pneg %p107
        %p263 = pneg %p104
        %p264 = pneg %p128
        %p265 = pneg %p125
        %p266 = pneg %p154
        %p267 = pneg %p151
        %s268 = sand.u32 %s141, 1
        %s269 = scalar_lea.sflag [#allocation4], %s268
        %s270 = sand.u32 %s141, 1
        %s271 = smul.addr %s270, 512
        %s272 = scalar_lea.vmem [#allocation8], %s271
        %s273 = smul.u32 64, %s23
        %s274 = smul.u32 64, %s23
        %v275 = vld [vmem:[%s238] sm:$0xff]
        %v276 = vld [vmem:[%s238 + $0x8] sm:$0xff]
        %v277 = vld [vmem:[%s238 + $0x10] sm:$0xff]
        %v278 = vld [vmem:[%s238 + $0x18] sm:$0xff]
        %v279 = vld [vmem:[%s238 + $0x20] sm:$0xff]
        %v280 = vld [vmem:[%s238 + $0x28] sm:$0xff]
        %v281 = vld [vmem:[%s238 + $0x30] sm:$0xff]
        %v282 = vld [vmem:[%s238 + $0x38] sm:$0xff]
        %v283 = vld [vmem:[%s238 + $0x40] sm:$0xff]
        %v284 = vld [vmem:[%s238 + $0x48] sm:$0xff]
        %v285 = vld [vmem:[%s238 + $0x50] sm:$0xff]
        %v286 = vld [vmem:[%s238 + $0x58] sm:$0xff]
        %v287 = vld [vmem:[%s238 + $0x60] sm:$0xff]
        %v288 = vld [vmem:[%s238 + $0x68] sm:$0xff]
        %v289 = vld [vmem:[%s238 + $0x70] sm:$0xff]
        %v290 = vld [vmem:[%s238 + $0x78] sm:$0xff]
        %v291 = vld [vmem:[%s238 + $0x80] sm:$0xff]
        %v292 = vld [vmem:[%s238 + $0x88] sm:$0xff]
        %v293 = vld [vmem:[%s238 + $0x90] sm:$0xff]
        %v294 = vld [vmem:[%s238 + $0x98] sm:$0xff]
        %v295 = vld [vmem:[%s238 + $0xa0] sm:$0xff]
        %v296 = vld [vmem:[%s238 + $0xa8] sm:$0xff]
        %v297 = vld [vmem:[%s238 + $0xb0] sm:$0xff]
        %v298 = vld [vmem:[%s238 + $0xb8] sm:$0xff]
        %v299 = vld [vmem:[%s238 + $0xc0] sm:$0xff]
        %v300 = vld [vmem:[%s238 + $0xc8] sm:$0xff]
        %v301 = vld [vmem:[%s238 + $0xd0] sm:$0xff]
        %v302 = vld [vmem:[%s238 + $0xd8] sm:$0xff]
        %v303 = vld [vmem:[%s238 + $0xe0] sm:$0xff]
        %v304 = vld [vmem:[%s238 + $0xe8] sm:$0xff]
        %v305 = vld [vmem:[%s238 + $0xf0] sm:$0xff]
        %v306 = vld [vmem:[%s238 + $0xf8] sm:$0xff]
        %v307 = vld [vmem:[%s238 + $0x100] sm:$0xff]
        %v308 = vld [vmem:[%s238 + $0x108] sm:$0xff]
        %v309 = vld [vmem:[%s238 + $0x110] sm:$0xff]
        %v310 = vld [vmem:[%s238 + $0x118] sm:$0xff]
        %v311 = vld [vmem:[%s238 + $0x120] sm:$0xff]
        %v312 = vld [vmem:[%s238 + $0x128] sm:$0xff]
        %v313 = vld [vmem:[%s238 + $0x130] sm:$0xff]
        %v314 = vld [vmem:[%s238 + $0x138] sm:$0xff]
        %v315 = vld [vmem:[%s238 + $0x140] sm:$0xff]
        %v316 = vld [vmem:[%s238 + $0x148] sm:$0xff]
        %v317 = vld [vmem:[%s238 + $0x150] sm:$0xff]
        %v318 = vld [vmem:[%s238 + $0x158] sm:$0xff]
        %v319 = vld [vmem:[%s238 + $0x160] sm:$0xff]
        %v320 = vld [vmem:[%s238 + $0x168] sm:$0xff]
        %v321 = vld [vmem:[%s238 + $0x170] sm:$0xff]
        %v322 = vld [vmem:[%s238 + $0x178] sm:$0xff]
        %v323 = vld [vmem:[%s238 + $0x180] sm:$0xff]
        %v324 = vld [vmem:[%s238 + $0x188] sm:$0xff]
        %v325 = vld [vmem:[%s238 + $0x190] sm:$0xff]
        %v326 = vld [vmem:[%s238 + $0x198] sm:$0xff]
        %v327 = vld [vmem:[%s238 + $0x1a0] sm:$0xff]
        %v328 = vld [vmem:[%s238 + $0x1a8] sm:$0xff]
        %v329 = vld [vmem:[%s238 + $0x1b0] sm:$0xff]
        %v330 = vld [vmem:[%s238 + $0x1b8] sm:$0xff]
        %v331 = vld [vmem:[%s238 + $0x1c0] sm:$0xff]
        %v332 = vld [vmem:[%s238 + $0x1c8] sm:$0xff]
        %v333 = vld [vmem:[%s238 + $0x1d0] sm:$0xff]
        %v334 = vld [vmem:[%s238 + $0x1d8] sm:$0xff]
        %v335 = vld [vmem:[%s238 + $0x1e0] sm:$0xff]
        %v336 = vld [vmem:[%s238 + $0x1e8] sm:$0xff]
        %v337 = vld [vmem:[%s238 + $0x1f0] sm:$0xff]
        %v338 = vld [vmem:[%s238 + $0x1f8] sm:$0xff]
        %v339 = vld [vmem:[#allocation5] sm:$0xff]
        %v340 = vld [vmem:[#allocation5 + $0x8] sm:$0xff]
        %v341 = vld [vmem:[#allocation5 + $0x10] sm:$0xff]
        %v342 = vld [vmem:[#allocation5 + $0x18] sm:$0xff]
        %v343 = vld [vmem:[#allocation5 + $0x20] sm:$0xff]
        %v344 = vld [vmem:[#allocation5 + $0x28] sm:$0xff]
        %v345 = vld [vmem:[#allocation5 + $0x30] sm:$0xff]
        %v346 = vld [vmem:[#allocation5 + $0x38] sm:$0xff]
        %v347 = vld [vmem:[#allocation5 + $0x40] sm:$0xff]
        %v348 = vld [vmem:[#allocation5 + $0x48] sm:$0xff]
        %v349 = vld [vmem:[#allocation5 + $0x50] sm:$0xff]
        %v350 = vld [vmem:[#allocation5 + $0x58] sm:$0xff]
        %v351 = vld [vmem:[#allocation5 + $0x60] sm:$0xff]
        %v352 = vld [vmem:[#allocation5 + $0x68] sm:$0xff]
        %v353 = vld [vmem:[#allocation5 + $0x70] sm:$0xff]
        %v354 = vld [vmem:[#allocation5 + $0x78] sm:$0xff]
        %v355 = vld [vmem:[#allocation5 + $0x80] sm:$0xff]
        %v356 = vld [vmem:[#allocation5 + $0x88] sm:$0xff]
        %v357 = vld [vmem:[#allocation5 + $0x90] sm:$0xff]
        %v358 = vld [vmem:[#allocation5 + $0x98] sm:$0xff]
        %v359 = vld [vmem:[#allocation5 + $0xa0] sm:$0xff]
        %v360 = vld [vmem:[#allocation5 + $0xa8] sm:$0xff]
        %v361 = vld [vmem:[#allocation5 + $0xb0] sm:$0xff]
        %v362 = vld [vmem:[#allocation5 + $0xb8] sm:$0xff]
        %v363 = vld [vmem:[#allocation5 + $0xc0] sm:$0xff]
        %v364 = vld [vmem:[#allocation5 + $0xc8] sm:$0xff]
        %v365 = vld [vmem:[#allocation5 + $0xd0] sm:$0xff]
        %v366 = vld [vmem:[#allocation5 + $0xd8] sm:$0xff]
        %v367 = vld [vmem:[#allocation5 + $0xe0] sm:$0xff]
        %v368 = vld [vmem:[#allocation5 + $0xe8] sm:$0xff]
        %v369 = vld [vmem:[#allocation5 + $0xf0] sm:$0xff]
        %v370 = vld [vmem:[#allocation5 + $0xf8] sm:$0xff]
        %v371 = vld [vmem:[%s2] sm:$0x3]
        %v373 = vlaneseq
        %v374 = vshrl.u32 %v373, 7
        %v375 = vsub.s32 0, %v374
        %v376 = vrot.slane %v371, %v375
        %v377 = vlaneseq
        %v378 = vshrl.u32 %v377, 7
        %v379 = vsub.s32 1, %v378
        %v380 = vrot.slane %v371, %v379
        %v447 = vunpack.c.l.b16 %v275
        %v448 = vunpack.c.h.b16 %v275
        %v449 = vunpack.c.l.b16 %v276
        %v450 = vunpack.c.h.b16 %v276
        %v451 = vunpack.c.l.b16 %v277
        %v452 = vunpack.c.h.b16 %v277
        %v453 = vunpack.c.l.b16 %v278
        %v454 = vunpack.c.h.b16 %v278
        %v455 = vunpack.c.l.b16 %v279
        %v456 = vunpack.c.h.b16 %v279
        %v457 = vunpack.c.l.b16 %v280
        %v458 = vunpack.c.h.b16 %v280
        %v459 = vunpack.c.l.b16 %v281
        %v460 = vunpack.c.h.b16 %v281
        %v461 = vunpack.c.l.b16 %v282
        %v462 = vunpack.c.h.b16 %v282
        %v463 = vunpack.c.l.b16 %v283
        %v464 = vunpack.c.h.b16 %v283
        %v465 = vunpack.c.l.b16 %v284
        %v466 = vunpack.c.h.b16 %v284
        %v467 = vunpack.c.l.b16 %v285
        %v468 = vunpack.c.h.b16 %v285
        %v469 = vunpack.c.l.b16 %v286
        %v470 = vunpack.c.h.b16 %v286
        %v471 = vunpack.c.l.b16 %v287
        %v472 = vunpack.c.h.b16 %v287
        %v473 = vunpack.c.l.b16 %v288
        %v474 = vunpack.c.h.b16 %v288
        %v475 = vunpack.c.l.b16 %v289
        %v476 = vunpack.c.h.b16 %v289
        %v477 = vunpack.c.l.b16 %v290
        %v478 = vunpack.c.h.b16 %v290
        %v479 = vunpack.c.l.b16 %v291
        %v480 = vunpack.c.h.b16 %v291
        %v481 = vunpack.c.l.b16 %v292
        %v482 = vunpack.c.h.b16 %v292
        %v483 = vunpack.c.l.b16 %v293
        %v484 = vunpack.c.h.b16 %v293
        %v485 = vunpack.c.l.b16 %v294
        %v486 = vunpack.c.h.b16 %v294
        %v487 = vunpack.c.l.b16 %v295
        %v488 = vunpack.c.h.b16 %v295
        %v489 = vunpack.c.l.b16 %v296
        %v490 = vunpack.c.h.b16 %v296
        %v491 = vunpack.c.l.b16 %v297
        %v492 = vunpack.c.h.b16 %v297
        %v493 = vunpack.c.l.b16 %v298
        %v494 = vunpack.c.h.b16 %v298
        %v495 = vunpack.c.l.b16 %v299
        %v496 = vunpack.c.h.b16 %v299
        %v497 = vunpack.c.l.b16 %v300
        %v498 = vunpack.c.h.b16 %v300
        %v499 = vunpack.c.l.b16 %v301
        %v500 = vunpack.c.h.b16 %v301
        %v501 = vunpack.c.l.b16 %v302
        %v502 = vunpack.c.h.b16 %v302
        %v503 = vunpack.c.l.b16 %v303
        %v504 = vunpack.c.h.b16 %v303
        %v505 = vunpack.c.l.b16 %v304
        %v506 = vunpack.c.h.b16 %v304
        %v507 = vunpack.c.l.b16 %v305
        %v508 = vunpack.c.h.b16 %v305
        %v509 = vunpack.c.l.b16 %v306
        %v510 = vunpack.c.h.b16 %v306
        %v511 = vunpack.c.l.b16 %v307
        %v512 = vunpack.c.h.b16 %v307
        %v513 = vunpack.c.l.b16 %v308
        %v514 = vunpack.c.h.b16 %v308
        %v515 = vunpack.c.l.b16 %v309
        %v516 = vunpack.c.h.b16 %v309
        %v517 = vunpack.c.l.b16 %v310
        %v518 = vunpack.c.h.b16 %v310
        %v519 = vunpack.c.l.b16 %v311
        %v520 = vunpack.c.h.b16 %v311
        %v521 = vunpack.c.l.b16 %v312
        %v522 = vunpack.c.h.b16 %v312
        %v523 = vunpack.c.l.b16 %v313
        %v524 = vunpack.c.h.b16 %v313
        %v525 = vunpack.c.l.b16 %v314
        %v526 = vunpack.c.h.b16 %v314
        %v527 = vunpack.c.l.b16 %v315
        %v528 = vunpack.c.h.b16 %v315
        %v529 = vunpack.c.l.b16 %v316
        %v530 = vunpack.c.h.b16 %v316
        %v531 = vunpack.c.l.b16 %v317
        %v532 = vunpack.c.h.b16 %v317
        %v533 = vunpack.c.l.b16 %v318
        %v534 = vunpack.c.h.b16 %v318
        %v535 = vunpack.c.l.b16 %v319
        %v536 = vunpack.c.h.b16 %v319
        %v537 = vunpack.c.l.b16 %v320
        %v538 = vunpack.c.h.b16 %v320
        %v539 = vunpack.c.l.b16 %v321
        %v540 = vunpack.c.h.b16 %v321
        %v541 = vunpack.c.l.b16 %v322
        %v542 = vunpack.c.h.b16 %v322
        %v543 = vunpack.c.l.b16 %v323
        %v544 = vunpack.c.h.b16 %v323
        %v545 = vunpack.c.l.b16 %v324
        %v546 = vunpack.c.h.b16 %v324
        %v547 = vunpack.c.l.b16 %v325
        %v548 = vunpack.c.h.b16 %v325
        %v549 = vunpack.c.l.b16 %v326
        %v550 = vunpack.c.h.b16 %v326
        %v551 = vunpack.c.l.b16 %v327
        %v552 = vunpack.c.h.b16 %v327
        %v553 = vunpack.c.l.b16 %v328
        %v554 = vunpack.c.h.b16 %v328
        %v555 = vunpack.c.l.b16 %v329
        %v556 = vunpack.c.h.b16 %v329
        %v557 = vunpack.c.l.b16 %v330
        %v558 = vunpack.c.h.b16 %v330
        %v559 = vunpack.c.l.b16 %v331
        %v560 = vunpack.c.h.b16 %v331
        %v561 = vunpack.c.l.b16 %v332
        %v562 = vunpack.c.h.b16 %v332
        %v563 = vunpack.c.l.b16 %v333
        %v564 = vunpack.c.h.b16 %v333
        %v565 = vunpack.c.l.b16 %v334
        %v566 = vunpack.c.h.b16 %v334
        %v567 = vunpack.c.l.b16 %v335
        %v568 = vunpack.c.h.b16 %v335
        %v569 = vunpack.c.l.b16 %v336
        %v570 = vunpack.c.h.b16 %v336
        %v571 = vunpack.c.l.b16 %v337
        %v572 = vunpack.c.h.b16 %v337
        %v573 = vunpack.c.l.b16 %v338
        %v574 = vunpack.c.h.b16 %v338
        %v575 = vpack.c.b16 %v449, %v447
        %v576 = vpack.c.b16 %v450, %v448
        %v577 = vpack.c.b16 %v453, %v451
        %v578 = vpack.c.b16 %v454, %v452
        %v579 = vpack.c.b16 %v457, %v455
        %v580 = vpack.c.b16 %v458, %v456
        %v581 = vpack.c.b16 %v461, %v459
        %v582 = vpack.c.b16 %v462, %v460
        %v583 = vpack.c.b16 %v465, %v463
        %v584 = vpack.c.b16 %v466, %v464
        %v585 = vpack.c.b16 %v469, %v467
        %v586 = vpack.c.b16 %v470, %v468
        %v587 = vpack.c.b16 %v473, %v471
        %v588 = vpack.c.b16 %v474, %v472
        %v589 = vpack.c.b16 %v477, %v475
        %v590 = vpack.c.b16 %v478, %v476
        %v591 = vpack.c.b16 %v481, %v479
        %v592 = vpack.c.b16 %v482, %v480
        %v593 = vpack.c.b16 %v485, %v483
        %v594 = vpack.c.b16 %v486, %v484
        %v595 = vpack.c.b16 %v489, %v487
        %v596 = vpack.c.b16 %v490, %v488
        %v597 = vpack.c.b16 %v493, %v491
        %v598 = vpack.c.b16 %v494, %v492
        %v599 = vpack.c.b16 %v497, %v495
        %v600 = vpack.c.b16 %v498, %v496
        %v601 = vpack.c.b16 %v501, %v499
        %v602 = vpack.c.b16 %v502, %v500
        %v603 = vpack.c.b16 %v505, %v503
        %v604 = vpack.c.b16 %v506, %v504
        %v605 = vpack.c.b16 %v509, %v507
        %v606 = vpack.c.b16 %v510, %v508
        %v607 = vpack.c.b16 %v513, %v511
        %v608 = vpack.c.b16 %v514, %v512
        %v609 = vpack.c.b16 %v517, %v515
        %v610 = vpack.c.b16 %v518, %v516
        %v611 = vpack.c.b16 %v521, %v519
        %v612 = vpack.c.b16 %v522, %v520
        %v613 = vpack.c.b16 %v525, %v523
        %v614 = vpack.c.b16 %v526, %v524
        %v615 = vpack.c.b16 %v529, %v527
        %v616 = vpack.c.b16 %v530, %v528
        %v617 = vpack.c.b16 %v533, %v531
        %v618 = vpack.c.b16 %v534, %v532
        %v619 = vpack.c.b16 %v537, %v535
        %v620 = vpack.c.b16 %v538, %v536
        %v621 = vpack.c.b16 %v541, %v539
        %v622 = vpack.c.b16 %v542, %v540
        %v623 = vpack.c.b16 %v545, %v543
        %v624 = vpack.c.b16 %v546, %v544
        %v625 = vpack.c.b16 %v549, %v547
        %v626 = vpack.c.b16 %v550, %v548
        %v627 = vpack.c.b16 %v553, %v551
        %v628 = vpack.c.b16 %v554, %v552
        %v629 = vpack.c.b16 %v557, %v555
        %v630 = vpack.c.b16 %v558, %v556
        %v631 = vpack.c.b16 %v561, %v559
        %v632 = vpack.c.b16 %v562, %v560
        %v633 = vpack.c.b16 %v565, %v563
        %v634 = vpack.c.b16 %v566, %v564
        %v635 = vpack.c.b16 %v569, %v567
        %v636 = vpack.c.b16 %v570, %v568
        %v637 = vpack.c.b16 %v573, %v571
        %v638 = vpack.c.b16 %v574, %v572
        %v735 = vunpack.c.l.b16 %v339
        %v736 = vunpack.c.h.b16 %v339
        %v737 = vunpack.c.l.b16 %v340
        %v738 = vunpack.c.h.b16 %v340
        %v739 = vunpack.c.l.b16 %v341
        %v740 = vunpack.c.h.b16 %v341
        %v741 = vunpack.c.l.b16 %v342
        %v742 = vunpack.c.h.b16 %v342
        %v743 = vunpack.c.l.b16 %v343
        %v744 = vunpack.c.h.b16 %v343
        %v745 = vunpack.c.l.b16 %v344
        %v746 = vunpack.c.h.b16 %v344
        %v747 = vunpack.c.l.b16 %v345
        %v748 = vunpack.c.h.b16 %v345
        %v749 = vunpack.c.l.b16 %v346
        %v750 = vunpack.c.h.b16 %v346
        %v751 = vunpack.c.l.b16 %v347
        %v752 = vunpack.c.h.b16 %v347
        %v753 = vunpack.c.l.b16 %v348
        %v754 = vunpack.c.h.b16 %v348
        %v755 = vunpack.c.l.b16 %v349
        %v756 = vunpack.c.h.b16 %v349
        %v757 = vunpack.c.l.b16 %v350
        %v758 = vunpack.c.h.b16 %v350
        %v759 = vunpack.c.l.b16 %v351
        %v760 = vunpack.c.h.b16 %v351
        %v761 = vunpack.c.l.b16 %v352
        %v762 = vunpack.c.h.b16 %v352
        %v763 = vunpack.c.l.b16 %v353
        %v764 = vunpack.c.h.b16 %v353
        %v765 = vunpack.c.l.b16 %v354
        %v766 = vunpack.c.h.b16 %v354
        %v767 = vunpack.c.l.b16 %v355
        %v768 = vunpack.c.h.b16 %v355
        %v769 = vunpack.c.l.b16 %v356
        %v770 = vunpack.c.h.b16 %v356
        %v771 = vunpack.c.l.b16 %v357
        %v772 = vunpack.c.h.b16 %v357
        %v773 = vunpack.c.l.b16 %v358
        %v774 = vunpack.c.h.b16 %v358
        %v775 = vunpack.c.l.b16 %v359
        %v776 = vunpack.c.h.b16 %v359
        %v777 = vunpack.c.l.b16 %v360
        %v778 = vunpack.c.h.b16 %v360
        %v779 = vunpack.c.l.b16 %v361
        %v780 = vunpack.c.h.b16 %v361
        %v781 = vunpack.c.l.b16 %v362
        %v782 = vunpack.c.h.b16 %v362
        %v783 = vunpack.c.l.b16 %v363
        %v784 = vunpack.c.h.b16 %v363
        %v785 = vunpack.c.l.b16 %v364
        %v786 = vunpack.c.h.b16 %v364
        %v787 = vunpack.c.l.b16 %v365
        %v788 = vunpack.c.h.b16 %v365
        %v789 = vunpack.c.l.b16 %v366
        %v790 = vunpack.c.h.b16 %v366
        %v791 = vunpack.c.l.b16 %v367
        %v792 = vunpack.c.h.b16 %v367
        %v793 = vunpack.c.l.b16 %v368
        %v794 = vunpack.c.h.b16 %v368
        %v795 = vunpack.c.l.b16 %v369
        %v796 = vunpack.c.h.b16 %v369
        %v797 = vunpack.c.l.b16 %v370
        %v798 = vunpack.c.h.b16 %v370
        %v799 = vpack.c.b16 %v737, %v735
        %v800 = vpack.c.b16 %v738, %v736
        %v801 = vpack.c.b16 %v741, %v739
        %v802 = vpack.c.b16 %v742, %v740
        %v803 = vpack.c.b16 %v745, %v743
        %v804 = vpack.c.b16 %v746, %v744
        %v805 = vpack.c.b16 %v749, %v747
        %v806 = vpack.c.b16 %v750, %v748
        %v807 = vpack.c.b16 %v753, %v751
        %v808 = vpack.c.b16 %v754, %v752
        %v809 = vpack.c.b16 %v757, %v755
        %v810 = vpack.c.b16 %v758, %v756
        %v811 = vpack.c.b16 %v761, %v759
        %v812 = vpack.c.b16 %v762, %v760
        %v813 = vpack.c.b16 %v765, %v763
        %v814 = vpack.c.b16 %v766, %v764
        %v815 = vpack.c.b16 %v769, %v767
        %v816 = vpack.c.b16 %v770, %v768
        %v817 = vpack.c.b16 %v773, %v771
        %v818 = vpack.c.b16 %v774, %v772
        %v819 = vpack.c.b16 %v777, %v775
        %v820 = vpack.c.b16 %v778, %v776
        %v821 = vpack.c.b16 %v781, %v779
        %v822 = vpack.c.b16 %v782, %v780
        %v823 = vpack.c.b16 %v785, %v783
        %v824 = vpack.c.b16 %v786, %v784
        %v825 = vpack.c.b16 %v789, %v787
        %v826 = vpack.c.b16 %v790, %v788
        %v827 = vpack.c.b16 %v793, %v791
        %v828 = vpack.c.b16 %v794, %v792
        %v829 = vpack.c.b16 %v797, %v795
        %v830 = vpack.c.b16 %v798, %v796
        %863 = vmatprep.subr.bf16.mxu0 %v800
        %864 = vmatpush1.bf16.msra.mxu0 %v799
        %865 = vmatprep.subr.bf16.mxu0 %v802
        %866 = vmatpush1.bf16.msra.mxu0 %v801
        %867 = vmatprep.subr.bf16.mxu0 %v804
        %868 = vmatpush1.bf16.msra.mxu0 %v803
        %869 = vmatprep.subr.bf16.mxu0 %v806
        %870 = vmatpush1.bf16.msra.mxu0 %v805
        %871 = vmatprep.subr.bf16.mxu0 %v808
        %872 = vmatpush1.bf16.msra.mxu0 %v807
        %873 = vmatprep.subr.bf16.mxu0 %v810
        %874 = vmatpush1.bf16.msra.mxu0 %v809
        %875 = vmatprep.subr.bf16.mxu0 %v812
        %876 = vmatpush1.bf16.msra.mxu0 %v811
        %877 = vmatprep.subr.bf16.mxu0 %v814
        %878 = vmatpush1.bf16.msra.mxu0 %v813
        %879 = vmatprep.subr.bf16.mxu0 %v816
        %880 = vmatpush1.bf16.msra.mxu0 %v815
        %881 = vmatprep.subr.bf16.mxu0 %v818
        %882 = vmatpush1.bf16.msra.mxu0 %v817
        %883 = vmatprep.subr.bf16.mxu0 %v820
        %884 = vmatpush1.bf16.msra.mxu0 %v819
        %885 = vmatprep.subr.bf16.mxu0 %v822
        %886 = vmatpush1.bf16.msra.mxu0 %v821
        %887 = vmatprep.subr.bf16.mxu0 %v824
        %888 = vmatpush1.bf16.msra.mxu0 %v823
        %889 = vmatprep.subr.bf16.mxu0 %v826
        %890 = vmatpush1.bf16.msra.mxu0 %v825
        %891 = vmatprep.subr.bf16.mxu0 %v828
        %892 = vmatpush1.bf16.msra.mxu0 %v827
        %893 = vmatprep.subr.bf16.mxu0 %v830
        %894 = vmatpush1.bf16.msra.mxu0 %v829
        %895 = vmatprep.mubr.bf16.mxu0 %v576
        %896 = vmatmul.mubr.bf16.gmra.mrb[0].mxu0 %v575
        %v897 = vpop.f32.mrb[0].mxu0
        %v898 = vadd.f32 %v376, %v897
        %v899 = vpop.f32.mrb[0].mxu0
        %v900 = vadd.f32 %v380, %v899
        %v901 = vpop.f32.mrb[0].mxu0
        %v902 = vadd.f32 %v376, %v901
        %v903 = vpop.f32.mrb[0].mxu0
        %v904 = vadd.f32 %v380, %v903
        %905 = vmatprep.mubr.bf16.mxu0 %v578
        %906 = vmatmul.mubr.bf16.gmra.mrb[0].mxu0 %v577
        %v907 = vpop.f32.mrb[0].mxu0
        %v908 = vadd.f32 %v376, %v907
        %v909 = vpop.f32.mrb[0].mxu0
        %v910 = vadd.f32 %v380, %v909
        %v911 = vpop.f32.mrb[0].mxu0
        %v912 = vadd.f32 %v376, %v911
        %v913 = vpop.f32.mrb[0].mxu0
        %v914 = vadd.f32 %v380, %v913
        %915 = vmatprep.mubr.bf16.mxu0 %v580
        %916 = vmatmul.mubr.bf16.gmra.mrb[0].mxu0 %v579
        %v917 = vpop.f32.mrb[0].mxu0
        %v918 = vadd.f32 %v376, %v917
        %v919 = vpop.f32.mrb[0].mxu0
        %v920 = vadd.f32 %v380, %v919
        %v921 = vpop.f32.mrb[0].mxu0
        %v922 = vadd.f32 %v376, %v921
        %v923 = vpop.f32.mrb[0].mxu0
        %v924 = vadd.f32 %v380, %v923
        %925 = vmatprep.mubr.bf16.mxu0 %v582
        %926 = vmatmul.mubr.bf16.gmra.mrb[0].mxu0 %v581
        %v927 = vpop.f32.mrb[0].mxu0
        %v928 = vadd.f32 %v376, %v927
        %v929 = vpop.f32.mrb[0].mxu0
        %v930 = vadd.f32 %v380, %v929
        %v931 = vpop.f32.mrb[0].mxu0
        %v932 = vadd.f32 %v376, %v931
        %v933 = vpop.f32.mrb[0].mxu0
        %v934 = vadd.f32 %v380, %v933
        %935 = vmatprep.mubr.bf16.mxu0 %v584
        %936 = vmatmul.mubr.bf16.gmra.mrb[0].mxu0 %v583
        %v937 = vpop.f32.mrb[0].mxu0
        %v938 = vadd.f32 %v376, %v937
        %v939 = vpop.f32.mrb[0].mxu0
        %v940 = vadd.f32 %v380, %v939
        %v941 = vpop.f32.mrb[0].mxu0
        %v942 = vadd.f32 %v376, %v941
        %v943 = vpop.f32.mrb[0].mxu0
        %v944 = vadd.f32 %v380, %v943
        %945 = vmatprep.mubr.bf16.mxu0 %v586
        %946 = vmatmul.mubr.bf16.gmra.mrb[0].mxu0 %v585
        %v947 = vpop.f32.mrb[0].mxu0
        %v948 = vadd.f32 %v376, %v947
        %v949 = vpop.f32.mrb[0].mxu0
        %v950 = vadd.f32 %v380, %v949
        %v951 = vpop.f32.mrb[0].mxu0
        %v952 = vadd.f32 %v376, %v951
        %v953 = vpop.f32.mrb[0].mxu0
        %v954 = vadd.f32 %v380, %v953
        %955 = vmatprep.mubr.bf16.mxu0 %v588
        %956 = vmatmul.mubr.bf16.gmra.mrb[0].mxu0 %v587
        %v957 = vpop.f32.mrb[0].mxu0
        %v958 = vadd.f32 %v376, %v957
        %v959 = vpop.f32.mrb[0].mxu0
        %v960 = vadd.f32 %v380, %v959
        %v961 = vpop.f32.mrb[0].mxu0
        %v962 = vadd.f32 %v376, %v961
        %v963 = vpop.f32.mrb[0].mxu0
        %v964 = vadd.f32 %v380, %v963
        %965 = vmatprep.mubr.bf16.mxu0 %v590
        %966 = vmatmul.mubr.bf16.gmra.mrb[0].mxu0 %v589
        %v967 = vpop.f32.mrb[0].mxu0
        %v968 = vadd.f32 %v376, %v967
        %v969 = vpop.f32.mrb[0].mxu0
        %v970 = vadd.f32 %v380, %v969
        %v971 = vpop.f32.mrb[0].mxu0
        %v972 = vadd.f32 %v376, %v971
        %v973 = vpop.f32.mrb[0].mxu0
        %v974 = vadd.f32 %v380, %v973
        %975 = vmatprep.mubr.bf16.mxu0 %v592
        %976 = vmatmul.mubr.bf16.gmra.mrb[0].mxu0 %v591
        %v977 = vpop.f32.mrb[0].mxu0
        %v978 = vadd.f32 %v376, %v977
        %v979 = vpop.f32.mrb[0].mxu0
        %v980 = vadd.f32 %v380, %v979
        %v981 = vpop.f32.mrb[0].mxu0
        %v982 = vadd.f32 %v376, %v981
        %v983 = vpop.f32.mrb[0].mxu0
        %v984 = vadd.f32 %v380, %v983
        %985 = vmatprep.mubr.bf16.mxu0 %v594
        %986 = vmatmul.mubr.bf16.gmra.mrb[0].mxu0 %v593
        %v987 = vpop.f32.mrb[0].mxu0
        %v988 = vadd.f32 %v376, %v987
        %v989 = vpop.f32.mrb[0].mxu0
        %v990 = vadd.f32 %v380, %v989
        %v991 = vpop.f32.mrb[0].mxu0
        %v992 = vadd.f32 %v376, %v991
        %v993 = vpop.f32.mrb[0].mxu0
        %v994 = vadd.f32 %v380, %v993
        %995 = vmatprep.mubr.bf16.mxu0 %v596
        %996 = vmatmul.mubr.bf16.gmra.mrb[0].mxu0 %v595
        %v997 = vpop.f32.mrb[0].mxu0
        %v998 = vadd.f32 %v376, %v997
        %v999 = vpop.f32.mrb[0].mxu0
        %v1000 = vadd.f32 %v380, %v999
        %v1001 = vpop.f32.mrb[0].mxu0
        %v1002 = vadd.f32 %v376, %v1001
        %v1003 = vpop.f32.mrb[0].mxu0
        %v1004 = vadd.f32 %v380, %v1003
        %1005 = vmatprep.mubr.bf16.mxu0 %v598
        %1006 = vmatmul.mubr.bf16.gmra.mrb[0].mxu0 %v597
        %v1007 = vpop.f32.mrb[0].mxu0
        %v1008 = vadd.f32 %v376, %v1007
        %v1009 = vpop.f32.mrb[0].mxu0
        %v1010 = vadd.f32 %v380, %v1009
        %v1011 = vpop.f32.mrb[0].mxu0
        %v1012 = vadd.f32 %v376, %v1011
        %v1013 = vpop.f32.mrb[0].mxu0
        %v1014 = vadd.f32 %v380, %v1013
        %1015 = vmatprep.mubr.bf16.mxu0 %v600
        %1016 = vmatmul.mubr.bf16.gmra.mrb[0].mxu0 %v599
        %v1017 = vpop.f32.mrb[0].mxu0
        %v1018 = vadd.f32 %v376, %v1017
        %v1019 = vpop.f32.mrb[0].mxu0
        %v1020 = vadd.f32 %v380, %v1019
        %v1021 = vpop.f32.mrb[0].mxu0
        %v1022 = vadd.f32 %v376, %v1021
        %v1023 = vpop.f32.mrb[0].mxu0
        %v1024 = vadd.f32 %v380, %v1023
        %1025 = vmatprep.mubr.bf16.mxu0 %v602
        %1026 = vmatmul.mubr.bf16.gmra.mrb[0].mxu0 %v601
        %v1027 = vpop.f32.mrb[0].mxu0
        %v1028 = vadd.f32 %v376, %v1027
        %v1029 = vpop.f32.mrb[0].mxu0
        %v1030 = vadd.f32 %v380, %v1029
        %v1031 = vpop.f32.mrb[0].mxu0
        %v1032 = vadd.f32 %v376, %v1031
        %v1033 = vpop.f32.mrb[0].mxu0
        %v1034 = vadd.f32 %v380, %v1033
        %1035 = vmatprep.mubr.bf16.mxu0 %v604
        %1036 = vmatmul.mubr.bf16.gmra.mrb[0].mxu0 %v603
        %v1037 = vpop.f32.mrb[0].mxu0
        %v1038 = vadd.f32 %v376, %v1037
        %v1039 = vpop.f32.mrb[0].mxu0
        %v1040 = vadd.f32 %v380, %v1039
        %v1041 = vpop.f32.mrb[0].mxu0
        %v1042 = vadd.f32 %v376, %v1041
        %v1043 = vpop.f32.mrb[0].mxu0
        %v1044 = vadd.f32 %v380, %v1043
        %1045 = vmatprep.mubr.bf16.mxu0 %v606
        %1046 = vmatmul.mubr.bf16.gmra.mrb[0].mxu0 %v605
        %v1047 = vpop.f32.mrb[0].mxu0
        %v1048 = vadd.f32 %v376, %v1047
        %v1049 = vpop.f32.mrb[0].mxu0
        %v1050 = vadd.f32 %v380, %v1049
        %v1051 = vpop.f32.mrb[0].mxu0
        %v1052 = vadd.f32 %v376, %v1051
        %v1053 = vpop.f32.mrb[0].mxu0
        %v1054 = vadd.f32 %v380, %v1053
        %1055 = vmatprep.mubr.bf16.mxu0 %v608
        %1056 = vmatmul.mubr.bf16.gmra.mrb[0].mxu0 %v607
        %v1057 = vpop.f32.mrb[0].mxu0
        %v1058 = vadd.f32 %v376, %v1057
        %v1059 = vpop.f32.mrb[0].mxu0
        %v1060 = vadd.f32 %v380, %v1059
        %v1061 = vpop.f32.mrb[0].mxu0
        %v1062 = vadd.f32 %v376, %v1061
        %v1063 = vpop.f32.mrb[0].mxu0
        %v1064 = vadd.f32 %v380, %v1063
        %1065 = vmatprep.mubr.bf16.mxu0 %v610
        %1066 = vmatmul.mubr.bf16.gmra.mrb[0].mxu0 %v609
        %v1067 = vpop.f32.mrb[0].mxu0
        %v1068 = vadd.f32 %v376, %v1067
        %v1069 = vpop.f32.mrb[0].mxu0
        %v1070 = vadd.f32 %v380, %v1069
        %v1071 = vpop.f32.mrb[0].mxu0
        %v1072 = vadd.f32 %v376, %v1071
        %v1073 = vpop.f32.mrb[0].mxu0
        %v1074 = vadd.f32 %v380, %v1073
        %1075 = vmatprep.mubr.bf16.mxu0 %v612
        %1076 = vmatmul.mubr.bf16.gmra.mrb[0].mxu0 %v611
        %v1077 = vpop.f32.mrb[0].mxu0
        %v1078 = vadd.f32 %v376, %v1077
        %v1079 = vpop.f32.mrb[0].mxu0
        %v1080 = vadd.f32 %v380, %v1079
        %v1081 = vpop.f32.mrb[0].mxu0
        %v1082 = vadd.f32 %v376, %v1081
        %v1083 = vpop.f32.mrb[0].mxu0
        %v1084 = vadd.f32 %v380, %v1083
        %1085 = vmatprep.mubr.bf16.mxu0 %v614
        %1086 = vmatmul.mubr.bf16.gmra.mrb[0].mxu0 %v613
        %v1087 = vpop.f32.mrb[0].mxu0
        %v1088 = vadd.f32 %v376, %v1087
        %v1089 = vpop.f32.mrb[0].mxu0
        %v1090 = vadd.f32 %v380, %v1089
        %v1091 = vpop.f32.mrb[0].mxu0
        %v1092 = vadd.f32 %v376, %v1091
        %v1093 = vpop.f32.mrb[0].mxu0
        %v1094 = vadd.f32 %v380, %v1093
        %1095 = vmatprep.mubr.bf16.mxu0 %v616
        %1096 = vmatmul.mubr.bf16.gmra.mrb[0].mxu0 %v615
        %v1097 = vpop.f32.mrb[0].mxu0
        %v1098 = vadd.f32 %v376, %v1097
        %v1099 = vpop.f32.mrb[0].mxu0
        %v1100 = vadd.f32 %v380, %v1099
        %v1101 = vpop.f32.mrb[0].mxu0
        %v1102 = vadd.f32 %v376, %v1101
        %v1103 = vpop.f32.mrb[0].mxu0
        %v1104 = vadd.f32 %v380, %v1103
        %1105 = vmatprep.mubr.bf16.mxu0 %v618
        %1106 = vmatmul.mubr.bf16.gmra.mrb[0].mxu0 %v617
        %v1107 = vpop.f32.mrb[0].mxu0
        %v1108 = vadd.f32 %v376, %v1107
        %v1109 = vpop.f32.mrb[0].mxu0
        %v1110 = vadd.f32 %v380, %v1109
        %v1111 = vpop.f32.mrb[0].mxu0
        %v1112 = vadd.f32 %v376, %v1111
        %v1113 = vpop.f32.mrb[0].mxu0
        %v1114 = vadd.f32 %v380, %v1113
        %1115 = vmatprep.mubr.bf16.mxu0 %v620
        %1116 = vmatmul.mubr.bf16.gmra.mrb[0].mxu0 %v619
        %v1117 = vpop.f32.mrb[0].mxu0
        %v1118 = vadd.f32 %v376, %v1117
        %v1119 = vpop.f32.mrb[0].mxu0
        %v1120 = vadd.f32 %v380, %v1119
        %v1121 = vpop.f32.mrb[0].mxu0
        %v1122 = vadd.f32 %v376, %v1121
        %v1123 = vpop.f32.mrb[0].mxu0
        %v1124 = vadd.f32 %v380, %v1123
        %1125 = vmatprep.mubr.bf16.mxu0 %v622
        %1126 = vmatmul.mubr.bf16.gmra.mrb[0].mxu0 %v621
        %v1127 = vpop.f32.mrb[0].mxu0
        %v1128 = vadd.f32 %v376, %v1127
        %v1129 = vpop.f32.mrb[0].mxu0
        %v1130 = vadd.f32 %v380, %v1129
        %v1131 = vpop.f32.mrb[0].mxu0
        %v1132 = vadd.f32 %v376, %v1131
        %v1133 = vpop.f32.mrb[0].mxu0
        %v1134 = vadd.f32 %v380, %v1133
        %1135 = vmatprep.mubr.bf16.mxu0 %v624
        %1136 = vmatmul.mubr.bf16.gmra.mrb[0].mxu0 %v623
        %v1137 = vpop.f32.mrb[0].mxu0
        %v1138 = vadd.f32 %v376, %v1137
        %v1139 = vpop.f32.mrb[0].mxu0
        %v1140 = vadd.f32 %v380, %v1139
        %v1141 = vpop.f32.mrb[0].mxu0
        %v1142 = vadd.f32 %v376, %v1141
        %v1143 = vpop.f32.mrb[0].mxu0
        %v1144 = vadd.f32 %v380, %v1143
        %1145 = vmatprep.mubr.bf16.mxu0 %v626
        %1146 = vmatmul.mubr.bf16.gmra.mrb[0].mxu0 %v625
        %v1147 = vpop.f32.mrb[0].mxu0
        %v1148 = vadd.f32 %v376, %v1147
        %v1149 = vpop.f32.mrb[0].mxu0
        %v1150 = vadd.f32 %v380, %v1149
        %v1151 = vpop.f32.mrb[0].mxu0
        %v1152 = vadd.f32 %v376, %v1151
        %v1153 = vpop.f32.mrb[0].mxu0
        %v1154 = vadd.f32 %v380, %v1153
        %1155 = vmatprep.mubr.bf16.mxu0 %v628
        %1156 = vmatmul.mubr.bf16.gmra.mrb[0].mxu0 %v627
        %v1157 = vpop.f32.mrb[0].mxu0
        %v1158 = vadd.f32 %v376, %v1157
        %v1159 = vpop.f32.mrb[0].mxu0
        %v1160 = vadd.f32 %v380, %v1159
        %v1161 = vpop.f32.mrb[0].mxu0
        %v1162 = vadd.f32 %v376, %v1161
        %v1163 = vpop.f32.mrb[0].mxu0
        %v1164 = vadd.f32 %v380, %v1163
        %1165 = vmatprep.mubr.bf16.mxu0 %v630
        %1166 = vmatmul.mubr.bf16.gmra.mrb[0].mxu0 %v629
        %v1167 = vpop.f32.mrb[0].mxu0
        %v1168 = vadd.f32 %v376, %v1167
        %v1169 = vpop.f32.mrb[0].mxu0
        %v1170 = vadd.f32 %v380, %v1169
        %v1171 = vpop.f32.mrb[0].mxu0
        %v1172 = vadd.f32 %v376, %v1171
        %v1173 = vpop.f32.mrb[0].mxu0
        %v1174 = vadd.f32 %v380, %v1173
        %1175 = vmatprep.mubr.bf16.mxu0 %v632
        %1176 = vmatmul.mubr.bf16.gmra.mrb[0].mxu0 %v631
        %v1177 = vpop.f32.mrb[0].mxu0
        %v1178 = vadd.f32 %v376, %v1177
        %v1179 = vpop.f32.mrb[0].mxu0
        %v1180 = vadd.f32 %v380, %v1179
        %v1181 = vpop.f32.mrb[0].mxu0
        %v1182 = vadd.f32 %v376, %v1181
        %v1183 = vpop.f32.mrb[0].mxu0
        %v1184 = vadd.f32 %v380, %v1183
        %1185 = vmatprep.mubr.bf16.mxu0 %v634
        %1186 = vmatmul.mubr.bf16.gmra.mrb[0].mxu0 %v633
        %v1187 = vpop.f32.mrb[0].mxu0
        %v1188 = vadd.f32 %v376, %v1187
        %v1189 = vpop.f32.mrb[0].mxu0
        %v1190 = vadd.f32 %v380, %v1189
        %v1191 = vpop.f32.mrb[0].mxu0
        %v1192 = vadd.f32 %v376, %v1191
        %v1193 = vpop.f32.mrb[0].mxu0
        %v1194 = vadd.f32 %v380, %v1193
        %1195 = vmatprep.mubr.bf16.mxu0 %v636
        %1196 = vmatmul.mubr.bf16.gmra.mrb[0].mxu0 %v635
        %v1197 = vpop.f32.mrb[0].mxu0
        %v1198 = vadd.f32 %v376, %v1197
        %v1199 = vpop.f32.mrb[0].mxu0
        %v1200 = vadd.f32 %v380, %v1199
        %v1201 = vpop.f32.mrb[0].mxu0
        %v1202 = vadd.f32 %v376, %v1201
        %v1203 = vpop.f32.mrb[0].mxu0
        %v1204 = vadd.f32 %v380, %v1203
        %1205 = vmatprep.mubr.bf16.mxu0 %v638
        %1206 = vmatmul.mubr.bf16.gmra.mrb[0].mxu0 %v637
        %v1207 = vpop.f32.mrb[0].mxu0
        %v1208 = vadd.f32 %v376, %v1207
        %v1209 = vpop.f32.mrb[0].mxu0
        %v1210 = vadd.f32 %v380, %v1209
        %v1211 = vpop.f32.mrb[0].mxu0
        %v1212 = vadd.f32 %v376, %v1211
        %v1213 = vpop.f32.mrb[0].mxu0
        %v1214 = vadd.f32 %v380, %v1213
        %1215 = vdwg.mxu0
        %v1216 = vmax.f32 %v898, 0.0
        %v1217 = vmax.f32 %v900, 0.0
        %v1218 = vmax.f32 %v902, 0.0
        %v1219 = vmax.f32 %v904, 0.0
        %v1220 = vmax.f32 %v908, 0.0
        %v1221 = vmax.f32 %v910, 0.0
        %v1222 = vmax.f32 %v912, 0.0
        %v1223 = vmax.f32 %v914, 0.0
        %v1224 = vmax.f32 %v918, 0.0
        %v1225 = vmax.f32 %v920, 0.0
        %v1226 = vmax.f32 %v922, 0.0
        %v1227 = vmax.f32 %v924, 0.0
        %v1228 = vmax.f32 %v928, 0.0
        %v1229 = vmax.f32 %v930, 0.0
        %v1230 = vmax.f32 %v932, 0.0
        %v1231 = vmax.f32 %v934, 0.0
        %v1232 = vmax.f32 %v938, 0.0
        %v1233 = vmax.f32 %v940, 0.0
        %v1234 = vmax.f32 %v942, 0.0
        %v1235 = vmax.f32 %v944, 0.0
        %v1236 = vmax.f32 %v948, 0.0
        %v1237 = vmax.f32 %v950, 0.0
        %v1238 = vmax.f32 %v952, 0.0
        %v1239 = vmax.f32 %v954, 0.0
        %v1240 = vmax.f32 %v958, 0.0
        %v1241 = vmax.f32 %v960, 0.0
        %v1242 = vmax.f32 %v962, 0.0
        %v1243 = vmax.f32 %v964, 0.0
        %v1244 = vmax.f32 %v968, 0.0
        %v1245 = vmax.f32 %v970, 0.0
        %v1246 = vmax.f32 %v972, 0.0
        %v1247 = vmax.f32 %v974, 0.0
        %v1248 = vmax.f32 %v978, 0.0
        %v1249 = vmax.f32 %v980, 0.0
        %v1250 = vmax.f32 %v982, 0.0
        %v1251 = vmax.f32 %v984, 0.0
        %v1252 = vmax.f32 %v988, 0.0
        %v1253 = vmax.f32 %v990, 0.0
        %v1254 = vmax.f32 %v992, 0.0
        %v1255 = vmax.f32 %v994, 0.0
        %v1256 = vmax.f32 %v998, 0.0
        %v1257 = vmax.f32 %v1000, 0.0
        %v1258 = vmax.f32 %v1002, 0.0
        %v1259 = vmax.f32 %v1004, 0.0
        %v1260 = vmax.f32 %v1008, 0.0
        %v1261 = vmax.f32 %v1010, 0.0
        %v1262 = vmax.f32 %v1012, 0.0
        %v1263 = vmax.f32 %v1014, 0.0
        %v1264 = vmax.f32 %v1018, 0.0
        %v1265 = vmax.f32 %v1020, 0.0
        %v1266 = vmax.f32 %v1022, 0.0
        %v1267 = vmax.f32 %v1024, 0.0
        %v1268 = vmax.f32 %v1028, 0.0
        %v1269 = vmax.f32 %v1030, 0.0
        %v1270 = vmax.f32 %v1032, 0.0
        %v1271 = vmax.f32 %v1034, 0.0
        %v1272 = vmax.f32 %v1038, 0.0
        %v1273 = vmax.f32 %v1040, 0.0
        %v1274 = vmax.f32 %v1042, 0.0
        %v1275 = vmax.f32 %v1044, 0.0
        %v1276 = vmax.f32 %v1048, 0.0
        %v1277 = vmax.f32 %v1050, 0.0
        %v1278 = vmax.f32 %v1052, 0.0
        %v1279 = vmax.f32 %v1054, 0.0
        %v1280 = vmax.f32 %v1058, 0.0
        %v1281 = vmax.f32 %v1060, 0.0
        %v1282 = vmax.f32 %v1062, 0.0
        %v1283 = vmax.f32 %v1064, 0.0
        %v1284 = vmax.f32 %v1068, 0.0
        %v1285 = vmax.f32 %v1070, 0.0
        %v1286 = vmax.f32 %v1072, 0.0
        %v1287 = vmax.f32 %v1074, 0.0
        %v1288 = vmax.f32 %v1078, 0.0
        %v1289 = vmax.f32 %v1080, 0.0
        %v1290 = vmax.f32 %v1082, 0.0
        %v1291 = vmax.f32 %v1084, 0.0
        %v1292 = vmax.f32 %v1088, 0.0
        %v1293 = vmax.f32 %v1090, 0.0
        %v1294 = vmax.f32 %v1092, 0.0
        %v1295 = vmax.f32 %v1094, 0.0
        %v1296 = vmax.f32 %v1098, 0.0
        %v1297 = vmax.f32 %v1100, 0.0
        %v1298 = vmax.f32 %v1102, 0.0
        %v1299 = vmax.f32 %v1104, 0.0
        %v1300 = vmax.f32 %v1108, 0.0
        %v1301 = vmax.f32 %v1110, 0.0
        %v1302 = vmax.f32 %v1112, 0.0
        %v1303 = vmax.f32 %v1114, 0.0
        %v1304 = vmax.f32 %v1118, 0.0
        %v1305 = vmax.f32 %v1120, 0.0
        %v1306 = vmax.f32 %v1122, 0.0
        %v1307 = vmax.f32 %v1124, 0.0
        %v1308 = vmax.f32 %v1128, 0.0
        %v1309 = vmax.f32 %v1130, 0.0
        %v1310 = vmax.f32 %v1132, 0.0
        %v1311 = vmax.f32 %v1134, 0.0
        %v1312 = vmax.f32 %v1138, 0.0
        %v1313 = vmax.f32 %v1140, 0.0
        %v1314 = vmax.f32 %v1142, 0.0
        %v1315 = vmax.f32 %v1144, 0.0
        %v1316 = vmax.f32 %v1148, 0.0
        %v1317 = vmax.f32 %v1150, 0.0
        %v1318 = vmax.f32 %v1152, 0.0
        %v1319 = vmax.f32 %v1154, 0.0
        %v1320 = vmax.f32 %v1158, 0.0
        %v1321 = vmax.f32 %v1160, 0.0
        %v1322 = vmax.f32 %v1162, 0.0
        %v1323 = vmax.f32 %v1164, 0.0
        %v1324 = vmax.f32 %v1168, 0.0
        %v1325 = vmax.f32 %v1170, 0.0
        %v1326 = vmax.f32 %v1172, 0.0
        %v1327 = vmax.f32 %v1174, 0.0
        %v1328 = vmax.f32 %v1178, 0.0
        %v1329 = vmax.f32 %v1180, 0.0
        %v1330 = vmax.f32 %v1182, 0.0
        %v1331 = vmax.f32 %v1184, 0.0
        %v1332 = vmax.f32 %v1188, 0.0
        %v1333 = vmax.f32 %v1190, 0.0
        %v1334 = vmax.f32 %v1192, 0.0
        %v1335 = vmax.f32 %v1194, 0.0
        %v1336 = vmax.f32 %v1198, 0.0
        %v1337 = vmax.f32 %v1200, 0.0
        %v1338 = vmax.f32 %v1202, 0.0
        %v1339 = vmax.f32 %v1204, 0.0
        %v1340 = vmax.f32 %v1208, 0.0
        %v1341 = vmax.f32 %v1210, 0.0
        %v1342 = vmax.f32 %v1212, 0.0
        %v1343 = vmax.f32 %v1214, 0.0
        %v1344 = vpack.c.bf16 %v1218, %v1216
        %v1345 = vpack.c.bf16 %v1219, %v1217
        %v1346 = vpack.c.bf16 %v1222, %v1220
        %v1347 = vpack.c.bf16 %v1223, %v1221
        %v1348 = vpack.c.bf16 %v1226, %v1224
        %v1349 = vpack.c.bf16 %v1227, %v1225
        %v1350 = vpack.c.bf16 %v1230, %v1228
        %v1351 = vpack.c.bf16 %v1231, %v1229
        %v1352 = vpack.c.bf16 %v1234, %v1232
        %v1353 = vpack.c.bf16 %v1235, %v1233
        %v1354 = vpack.c.bf16 %v1238, %v1236
        %v1355 = vpack.c.bf16 %v1239, %v1237
        %v1356 = vpack.c.bf16 %v1242, %v1240
        %v1357 = vpack.c.bf16 %v1243, %v1241
        %v1358 = vpack.c.bf16 %v1246, %v1244
        %v1359 = vpack.c.bf16 %v1247, %v1245
        %v1360 = vpack.c.bf16 %v1250, %v1248
        %v1361 = vpack.c.bf16 %v1251, %v1249
        %v1362 = vpack.c.bf16 %v1254, %v1252
        %v1363 = vpack.c.bf16 %v1255, %v1253
        %v1364 = vpack.c.bf16 %v1258, %v1256
        %v1365 = vpack.c.bf16 %v1259, %v1257
        %v1366 = vpack.c.bf16 %v1262, %v1260
        %v1367 = vpack.c.bf16 %v1263, %v1261
        %v1368 = vpack.c.bf16 %v1266, %v1264
        %v1369 = vpack.c.bf16 %v1267, %v1265
        %v1370 = vpack.c.bf16 %v1270, %v1268
        %v1371 = vpack.c.bf16 %v1271, %v1269
        %v1372 = vpack.c.bf16 %v1274, %v1272
        %v1373 = vpack.c.bf16 %v1275, %v1273
        %v1374 = vpack.c.bf16 %v1278, %v1276
        %v1375 = vpack.c.bf16 %v1279, %v1277
        %v1376 = vpack.c.bf16 %v1282, %v1280
        %v1377 = vpack.c.bf16 %v1283, %v1281
        %v1378 = vpack.c.bf16 %v1286, %v1284
        %v1379 = vpack.c.bf16 %v1287, %v1285
        %v1380 = vpack.c.bf16 %v1290, %v1288
        %v1381 = vpack.c.bf16 %v1291, %v1289
        %v1382 = vpack.c.bf16 %v1294, %v1292
        %v1383 = vpack.c.bf16 %v1295, %v1293
        %v1384 = vpack.c.bf16 %v1298, %v1296
        %v1385 = vpack.c.bf16 %v1299, %v1297
        %v1386 = vpack.c.bf16 %v1302, %v1300
        %v1387 = vpack.c.bf16 %v1303, %v1301
        %v1388 = vpack.c.bf16 %v1306, %v1304
        %v1389 = vpack.c.bf16 %v1307, %v1305
        %v1390 = vpack.c.bf16 %v1310, %v1308
        %v1391 = vpack.c.bf16 %v1311, %v1309
        %v1392 = vpack.c.bf16 %v1314, %v1312
        %v1393 = vpack.c.bf16 %v1315, %v1313
        %v1394 = vpack.c.bf16 %v1318, %v1316
        %v1395 = vpack.c.bf16 %v1319, %v1317
        %v1396 = vpack.c.bf16 %v1322, %v1320
        %v1397 = vpack.c.bf16 %v1323, %v1321
        %v1398 = vpack.c.bf16 %v1326, %v1324
        %v1399 = vpack.c.bf16 %v1327, %v1325
        %v1400 = vpack.c.bf16 %v1330, %v1328
        %v1401 = vpack.c.bf16 %v1331, %v1329
        %v1402 = vpack.c.bf16 %v1334, %v1332
        %v1403 = vpack.c.bf16 %v1335, %v1333
        %v1404 = vpack.c.bf16 %v1338, %v1336
        %v1405 = vpack.c.bf16 %v1339, %v1337
        %v1406 = vpack.c.bf16 %v1342, %v1340
        %v1407 = vpack.c.bf16 %v1343, %v1341
        %v1408 = vld [vmem:[#allocation7] sm:$0xff]
        %v1409 = vld [vmem:[#allocation7 + $0x8] sm:$0xff]
        %v1410 = vld [vmem:[#allocation7 + $0x10] sm:$0xff]
        %v1411 = vld [vmem:[#allocation7 + $0x18] sm:$0xff]
        %v1412 = vld [vmem:[#allocation7 + $0x20] sm:$0xff]
        %v1413 = vld [vmem:[#allocation7 + $0x28] sm:$0xff]
        %v1414 = vld [vmem:[#allocation7 + $0x30] sm:$0xff]
        %v1415 = vld [vmem:[#allocation7 + $0x38] sm:$0xff]
        %v1416 = vld [vmem:[#allocation7 + $0x40] sm:$0xff]
        %v1417 = vld [vmem:[#allocation7 + $0x48] sm:$0xff]
        %v1418 = vld [vmem:[#allocation7 + $0x50] sm:$0xff]
        %v1419 = vld [vmem:[#allocation7 + $0x58] sm:$0xff]
        %v1420 = vld [vmem:[#allocation7 + $0x60] sm:$0xff]
        %v1421 = vld [vmem:[#allocation7 + $0x68] sm:$0xff]
        %v1422 = vld [vmem:[#allocation7 + $0x70] sm:$0xff]
        %v1423 = vld [vmem:[#allocation7 + $0x78] sm:$0xff]
        %v1424 = vld [vmem:[#allocation7 + $0x80] sm:$0xff]
        %v1425 = vld [vmem:[#allocation7 + $0x88] sm:$0xff]
        %v1426 = vld [vmem:[#allocation7 + $0x90] sm:$0xff]
        %v1427 = vld [vmem:[#allocation7 + $0x98] sm:$0xff]
        %v1428 = vld [vmem:[#allocation7 + $0xa0] sm:$0xff]
        %v1429 = vld [vmem:[#allocation7 + $0xa8] sm:$0xff]
        %v1430 = vld [vmem:[#allocation7 + $0xb0] sm:$0xff]
        %v1431 = vld [vmem:[#allocation7 + $0xb8] sm:$0xff]
        %v1432 = vld [vmem:[#allocation7 + $0xc0] sm:$0xff]
        %v1433 = vld [vmem:[#allocation7 + $0xc8] sm:$0xff]
        %v1434 = vld [vmem:[#allocation7 + $0xd0] sm:$0xff]
        %v1435 = vld [vmem:[#allocation7 + $0xd8] sm:$0xff]
        %v1436 = vld [vmem:[#allocation7 + $0xe0] sm:$0xff]
        %v1437 = vld [vmem:[#allocation7 + $0xe8] sm:$0xff]
        %v1438 = vld [vmem:[#allocation7 + $0xf0] sm:$0xff]
        %v1439 = vld [vmem:[#allocation7 + $0xf8] sm:$0xff]
        %v1440 = vld [vmem:[%s4] sm:$0x3]
        %v1442 = vlaneseq
        %v1443 = vshrl.u32 %v1442, 7
        %v1444 = vsub.s32 0, %v1443
        %v1445 = vrot.slane %v1440, %v1444
        %v1446 = vlaneseq
        %v1447 = vshrl.u32 %v1446, 7
        %v1448 = vsub.s32 1, %v1447
        %v1449 = vrot.slane %v1440, %v1448
        %v1484 = vunpack.c.l.b16 %v1408
        %v1485 = vunpack.c.h.b16 %v1408
        %v1486 = vunpack.c.l.b16 %v1409
        %v1487 = vunpack.c.h.b16 %v1409
        %v1488 = vunpack.c.l.b16 %v1410
        %v1489 = vunpack.c.h.b16 %v1410
        %v1490 = vunpack.c.l.b16 %v1411
        %v1491 = vunpack.c.h.b16 %v1411
        %v1492 = vunpack.c.l.b16 %v1412
        %v1493 = vunpack.c.h.b16 %v1412
        %v1494 = vunpack.c.l.b16 %v1413
        %v1495 = vunpack.c.h.b16 %v1413
        %v1496 = vunpack.c.l.b16 %v1414
        %v1497 = vunpack.c.h.b16 %v1414
        %v1498 = vunpack.c.l.b16 %v1415
        %v1499 = vunpack.c.h.b16 %v1415
        %v1500 = vunpack.c.l.b16 %v1416
        %v1501 = vunpack.c.h.b16 %v1416
        %v1502 = vunpack.c.l.b16 %v1417
        %v1503 = vunpack.c.h.b16 %v1417
        %v1504 = vunpack.c.l.b16 %v1418
        %v1505 = vunpack.c.h.b16 %v1418
        %v1506 = vunpack.c.l.b16 %v1419
        %v1507 = vunpack.c.h.b16 %v1419
        %v1508 = vunpack.c.l.b16 %v1420
        %v1509 = vunpack.c.h.b16 %v1420
        %v1510 = vunpack.c.l.b16 %v1421
        %v1511 = vunpack.c.h.b16 %v1421
        %v1512 = vunpack.c.l.b16 %v1422
        %v1513 = vunpack.c.h.b16 %v1422
        %v1514 = vunpack.c.l.b16 %v1423
        %v1515 = vunpack.c.h.b16 %v1423
        %v1516 = vunpack.c.l.b16 %v1424
        %v1517 = vunpack.c.h.b16 %v1424
        %v1518 = vunpack.c.l.b16 %v1425
        %v1519 = vunpack.c.h.b16 %v1425
        %v1520 = vunpack.c.l.b16 %v1426
        %v1521 = vunpack.c.h.b16 %v1426
        %v1522 = vunpack.c.l.b16 %v1427
        %v1523 = vunpack.c.h.b16 %v1427
        %v1524 = vunpack.c.l.b16 %v1428
        %v1525 = vunpack.c.h.b16 %v1428
        %v1526 = vunpack.c.l.b16 %v1429
        %v1527 = vunpack.c.h.b16 %v1429
        %v1528 = vunpack.c.l.b16 %v1430
        %v1529 = vunpack.c.h.b16 %v1430
        %v1530 = vunpack.c.l.b16 %v1431
        %v1531 = vunpack.c.h.b16 %v1431
        %v1532 = vunpack.c.l.b16 %v1432
        %v1533 = vunpack.c.h.b16 %v1432
        %v1534 = vunpack.c.l.b16 %v1433
        %v1535 = vunpack.c.h.b16 %v1433
        %v1536 = vunpack.c.l.b16 %v1434
        %v1537 = vunpack.c.h.b16 %v1434
        %v1538 = vunpack.c.l.b16 %v1435
        %v1539 = vunpack.c.h.b16 %v1435
        %v1540 = vunpack.c.l.b16 %v1436
        %v1541 = vunpack.c.h.b16 %v1436
        %v1542 = vunpack.c.l.b16 %v1437
        %v1543 = vunpack.c.h.b16 %v1437
        %v1544 = vunpack.c.l.b16 %v1438
        %v1545 = vunpack.c.h.b16 %v1438
        %v1546 = vunpack.c.l.b16 %v1439
        %v1547 = vunpack.c.h.b16 %v1439
        %v1548 = vpack.c.b16 %v1486, %v1484
        %v1549 = vpack.c.b16 %v1487, %v1485
        %v1550 = vpack.c.b16 %v1490, %v1488
        %v1551 = vpack.c.b16 %v1491, %v1489
        %v1552 = vpack.c.b16 %v1494, %v1492
        %v1553 = vpack.c.b16 %v1495, %v1493
        %v1554 = vpack.c.b16 %v1498, %v1496
        %v1555 = vpack.c.b16 %v1499, %v1497
        %v1556 = vpack.c.b16 %v1502, %v1500
        %v1557 = vpack.c.b16 %v1503, %v1501
        %v1558 = vpack.c.b16 %v1506, %v1504
        %v1559 = vpack.c.b16 %v1507, %v1505
        %v1560 = vpack.c.b16 %v1510, %v1508
        %v1561 = vpack.c.b16 %v1511, %v1509
        %v1562 = vpack.c.b16 %v1514, %v1512
        %v1563 = vpack.c.b16 %v1515, %v1513
        %v1564 = vpack.c.b16 %v1518, %v1516
        %v1565 = vpack.c.b16 %v1519, %v1517
        %v1566 = vpack.c.b16 %v1522, %v1520
        %v1567 = vpack.c.b16 %v1523, %v1521
        %v1568 = vpack.c.b16 %v1526, %v1524
        %v1569 = vpack.c.b16 %v1527, %v1525
        %v1570 = vpack.c.b16 %v1530, %v1528
        %v1571 = vpack.c.b16 %v1531, %v1529
        %v1572 = vpack.c.b16 %v1534, %v1532
        %v1573 = vpack.c.b16 %v1535, %v1533
        %v1574 = vpack.c.b16 %v1538, %v1536
        %v1575 = vpack.c.b16 %v1539, %v1537
        %v1576 = vpack.c.b16 %v1542, %v1540
        %v1577 = vpack.c.b16 %v1543, %v1541
        %v1578 = vpack.c.b16 %v1546, %v1544
        %v1579 = vpack.c.b16 %v1547, %v1545
        %1612 = vmatprep.subr.bf16.mxu0 %v1549
        %1613 = vmatpush1.bf16.msra.mxu0 %v1548
        %1614 = vmatprep.subr.bf16.mxu0 %v1551
        %1615 = vmatpush1.bf16.msra.mxu0 %v1550
        %1616 = vmatprep.subr.bf16.mxu0 %v1553
        %1617 = vmatpush1.bf16.msra.mxu0 %v1552
        %1618 = vmatprep.subr.bf16.mxu0 %v1555
        %1619 = vmatpush1.bf16.msra.mxu0 %v1554
        %1620 = vmatprep.subr.bf16.mxu0 %v1557
        %1621 = vmatpush1.bf16.msra.mxu0 %v1556
        %1622 = vmatprep.subr.bf16.mxu0 %v1559
        %1623 = vmatpush1.bf16.msra.mxu0 %v1558
        %1624 = vmatprep.subr.bf16.mxu0 %v1561
        %1625 = vmatpush1.bf16.msra.mxu0 %v1560
        %1626 = vmatprep.subr.bf16.mxu0 %v1563
        %1627 = vmatpush1.bf16.msra.mxu0 %v1562
        %1628 = vmatprep.subr.bf16.mxu0 %v1565
        %1629 = vmatpush1.bf16.msra.mxu0 %v1564
        %1630 = vmatprep.subr.bf16.mxu0 %v1567
        %1631 = vmatpush1.bf16.msra.mxu0 %v1566
        %1632 = vmatprep.subr.bf16.mxu0 %v1569
        %1633 = vmatpush1.bf16.msra.mxu0 %v1568
        %1634 = vmatprep.subr.bf16.mxu0 %v1571
        %1635 = vmatpush1.bf16.msra.mxu0 %v1570
        %1636 = vmatprep.subr.bf16.mxu0 %v1573
        %1637 = vmatpush1.bf16.msra.mxu0 %v1572
        %1638 = vmatprep.subr.bf16.mxu0 %v1575
        %1639 = vmatpush1.bf16.msra.mxu0 %v1574
        %1640 = vmatprep.subr.bf16.mxu0 %v1577
        %1641 = vmatpush1.bf16.msra.mxu0 %v1576
        %1642 = vmatprep.subr.bf16.mxu0 %v1579
        %1643 = vmatpush1.bf16.msra.mxu0 %v1578
        %1644 = vmatprep.mubr.bf16.mxu0 %v1345
        %1645 = vmatmul.mubr.bf16.gmra.mrb[0].mxu0 %v1344
        %v1646 = vpop.f32.mrb[0].mxu0
        %v1647 = vadd.f32 %v1445, %v1646
        %v1648 = vpop.f32.mrb[0].mxu0
        %v1649 = vadd.f32 %v1449, %v1648
        %v1650 = vpop.f32.mrb[0].mxu0
        %v1651 = vadd.f32 %v1445, %v1650
        %v1652 = vpop.f32.mrb[0].mxu0
        %v1653 = vadd.f32 %v1449, %v1652
        %1654 = vmatprep.mubr.bf16.mxu0 %v1347
        %1655 = vmatmul.mubr.bf16.gmra.mrb[0].mxu0 %v1346
        %v1656 = vpop.f32.mrb[0].mxu0
        %v1657 = vadd.f32 %v1445, %v1656
        %v1658 = vpop.f32.mrb[0].mxu0
        %v1659 = vadd.f32 %v1449, %v1658
        %v1660 = vpop.f32.mrb[0].mxu0
        %v1661 = vadd.f32 %v1445, %v1660
        %v1662 = vpop.f32.mrb[0].mxu0
        %v1663 = vadd.f32 %v1449, %v1662
        %1664 = vmatprep.mubr.bf16.mxu0 %v1349
        %1665 = vmatmul.mubr.bf16.gmra.mrb[0].mxu0 %v1348
        %v1666 = vpop.f32.mrb[0].mxu0
        %v1667 = vadd.f32 %v1445, %v1666
        %v1668 = vpop.f32.mrb[0].mxu0
        %v1669 = vadd.f32 %v1449, %v1668
        %v1670 = vpop.f32.mrb[0].mxu0
        %v1671 = vadd.f32 %v1445, %v1670
        %v1672 = vpop.f32.mrb[0].mxu0
        %v1673 = vadd.f32 %v1449, %v1672
        %1674 = vmatprep.mubr.bf16.mxu0 %v1351
        %1675 = vmatmul.mubr.bf16.gmra.mrb[0].mxu0 %v1350
        %v1676 = vpop.f32.mrb[0].mxu0
        %v1677 = vadd.f32 %v1445, %v1676
        %v1678 = vpop.f32.mrb[0].mxu0
        %v1679 = vadd.f32 %v1449, %v1678
        %v1680 = vpop.f32.mrb[0].mxu0
        %v1681 = vadd.f32 %v1445, %v1680
        %v1682 = vpop.f32.mrb[0].mxu0
        %v1683 = vadd.f32 %v1449, %v1682
        %1684 = vmatprep.mubr.bf16.mxu0 %v1353
        %1685 = vmatmul.mubr.bf16.gmra.mrb[0].mxu0 %v1352
        %v1686 = vpop.f32.mrb[0].mxu0
        %v1687 = vadd.f32 %v1445, %v1686
        %v1688 = vpop.f32.mrb[0].mxu0
        %v1689 = vadd.f32 %v1449, %v1688
        %v1690 = vpop.f32.mrb[0].mxu0
        %v1691 = vadd.f32 %v1445, %v1690
        %v1692 = vpop.f32.mrb[0].mxu0
        %v1693 = vadd.f32 %v1449, %v1692
        %1694 = vmatprep.mubr.bf16.mxu0 %v1355
        %1695 = vmatmul.mubr.bf16.gmra.mrb[0].mxu0 %v1354
        %v1696 = vpop.f32.mrb[0].mxu0
        %v1697 = vadd.f32 %v1445, %v1696
        %v1698 = vpop.f32.mrb[0].mxu0
        %v1699 = vadd.f32 %v1449, %v1698
        %v1700 = vpop.f32.mrb[0].mxu0
        %v1701 = vadd.f32 %v1445, %v1700
        %v1702 = vpop.f32.mrb[0].mxu0
        %v1703 = vadd.f32 %v1449, %v1702
        %1704 = vmatprep.mubr.bf16.mxu0 %v1357
        %1705 = vmatmul.mubr.bf16.gmra.mrb[0].mxu0 %v1356
        %v1706 = vpop.f32.mrb[0].mxu0
        %v1707 = vadd.f32 %v1445, %v1706
        %v1708 = vpop.f32.mrb[0].mxu0
        %v1709 = vadd.f32 %v1449, %v1708
        %v1710 = vpop.f32.mrb[0].mxu0
        %v1711 = vadd.f32 %v1445, %v1710
        %v1712 = vpop.f32.mrb[0].mxu0
        %v1713 = vadd.f32 %v1449, %v1712
        %1714 = vmatprep.mubr.bf16.mxu0 %v1359
        %1715 = vmatmul.mubr.bf16.gmra.mrb[0].mxu0 %v1358
        %v1716 = vpop.f32.mrb[0].mxu0
        %v1717 = vadd.f32 %v1445, %v1716
        %v1718 = vpop.f32.mrb[0].mxu0
        %v1719 = vadd.f32 %v1449, %v1718
        %v1720 = vpop.f32.mrb[0].mxu0
        %v1721 = vadd.f32 %v1445, %v1720
        %v1722 = vpop.f32.mrb[0].mxu0
        %v1723 = vadd.f32 %v1449, %v1722
        %1724 = vmatprep.mubr.bf16.mxu0 %v1361
        %1725 = vmatmul.mubr.bf16.gmra.mrb[0].mxu0 %v1360
        %v1726 = vpop.f32.mrb[0].mxu0
        %v1727 = vadd.f32 %v1445, %v1726
        %v1728 = vpop.f32.mrb[0].mxu0
        %v1729 = vadd.f32 %v1449, %v1728
        %v1730 = vpop.f32.mrb[0].mxu0
        %v1731 = vadd.f32 %v1445, %v1730
        %v1732 = vpop.f32.mrb[0].mxu0
        %v1733 = vadd.f32 %v1449, %v1732
        %1734 = vmatprep.mubr.bf16.mxu0 %v1363
        %1735 = vmatmul.mubr.bf16.gmra.mrb[0].mxu0 %v1362
        %v1736 = vpop.f32.mrb[0].mxu0
        %v1737 = vadd.f32 %v1445, %v1736
        %v1738 = vpop.f32.mrb[0].mxu0
        %v1739 = vadd.f32 %v1449, %v1738
        %v1740 = vpop.f32.mrb[0].mxu0
        %v1741 = vadd.f32 %v1445, %v1740
        %v1742 = vpop.f32.mrb[0].mxu0
        %v1743 = vadd.f32 %v1449, %v1742
        %1744 = vmatprep.mubr.bf16.mxu0 %v1365
        %1745 = vmatmul.mubr.bf16.gmra.mrb[0].mxu0 %v1364
        %v1746 = vpop.f32.mrb[0].mxu0
        %v1747 = vadd.f32 %v1445, %v1746
        %v1748 = vpop.f32.mrb[0].mxu0
        %v1749 = vadd.f32 %v1449, %v1748
        %v1750 = vpop.f32.mrb[0].mxu0
        %v1751 = vadd.f32 %v1445, %v1750
        %v1752 = vpop.f32.mrb[0].mxu0
        %v1753 = vadd.f32 %v1449, %v1752
        %1754 = vmatprep.mubr.bf16.mxu0 %v1367
        %1755 = vmatmul.mubr.bf16.gmra.mrb[0].mxu0 %v1366
        %v1756 = vpop.f32.mrb[0].mxu0
        %v1757 = vadd.f32 %v1445, %v1756
        %v1758 = vpop.f32.mrb[0].mxu0
        %v1759 = vadd.f32 %v1449, %v1758
        %v1760 = vpop.f32.mrb[0].mxu0
        %v1761 = vadd.f32 %v1445, %v1760
        %v1762 = vpop.f32.mrb[0].mxu0
        %v1763 = vadd.f32 %v1449, %v1762
        %1764 = vmatprep.mubr.bf16.mxu0 %v1369
        %1765 = vmatmul.mubr.bf16.gmra.mrb[0].mxu0 %v1368
        %v1766 = vpop.f32.mrb[0].mxu0
        %v1767 = vadd.f32 %v1445, %v1766
        %v1768 = vpop.f32.mrb[0].mxu0
        %v1769 = vadd.f32 %v1449, %v1768
        %v1770 = vpop.f32.mrb[0].mxu0
        %v1771 = vadd.f32 %v1445, %v1770
        %v1772 = vpop.f32.mrb[0].mxu0
        %v1773 = vadd.f32 %v1449, %v1772
        %1774 = vmatprep.mubr.bf16.mxu0 %v1371
        %1775 = vmatmul.mubr.bf16.gmra.mrb[0].mxu0 %v1370
        %v1776 = vpop.f32.mrb[0].mxu0
        %v1777 = vadd.f32 %v1445, %v1776
        %v1778 = vpop.f32.mrb[0].mxu0
        %v1779 = vadd.f32 %v1449, %v1778
        %v1780 = vpop.f32.mrb[0].mxu0
        %v1781 = vadd.f32 %v1445, %v1780
        %v1782 = vpop.f32.mrb[0].mxu0
        %v1783 = vadd.f32 %v1449, %v1782
        %1784 = vmatprep.mubr.bf16.mxu0 %v1373
        %1785 = vmatmul.mubr.bf16.gmra.mrb[0].mxu0 %v1372
        %v1786 = vpop.f32.mrb[0].mxu0
        %v1787 = vadd.f32 %v1445, %v1786
        %v1788 = vpop.f32.mrb[0].mxu0
        %v1789 = vadd.f32 %v1449, %v1788
        %v1790 = vpop.f32.mrb[0].mxu0
        %v1791 = vadd.f32 %v1445, %v1790
        %v1792 = vpop.f32.mrb[0].mxu0
        %v1793 = vadd.f32 %v1449, %v1792
        %1794 = vmatprep.mubr.bf16.mxu0 %v1375
        %1795 = vmatmul.mubr.bf16.gmra.mrb[0].mxu0 %v1374
        %v1796 = vpop.f32.mrb[0].mxu0
        %v1797 = vadd.f32 %v1445, %v1796
        %v1798 = vpop.f32.mrb[0].mxu0
        %v1799 = vadd.f32 %v1449, %v1798
        %v1800 = vpop.f32.mrb[0].mxu0
        %v1801 = vadd.f32 %v1445, %v1800
        %v1802 = vpop.f32.mrb[0].mxu0
        %v1803 = vadd.f32 %v1449, %v1802
        %1804 = vmatprep.mubr.bf16.mxu0 %v1377
        %1805 = vmatmul.mubr.bf16.gmra.mrb[0].mxu0 %v1376
        %v1806 = vpop.f32.mrb[0].mxu0
        %v1807 = vadd.f32 %v1445, %v1806
        %v1808 = vpop.f32.mrb[0].mxu0
        %v1809 = vadd.f32 %v1449, %v1808
        %v1810 = vpop.f32.mrb[0].mxu0
        %v1811 = vadd.f32 %v1445, %v1810
        %v1812 = vpop.f32.mrb[0].mxu0
        %v1813 = vadd.f32 %v1449, %v1812
        %1814 = vmatprep.mubr.bf16.mxu0 %v1379
        %1815 = vmatmul.mubr.bf16.gmra.mrb[0].mxu0 %v1378
        %v1816 = vpop.f32.mrb[0].mxu0
        %v1817 = vadd.f32 %v1445, %v1816
        %v1818 = vpop.f32.mrb[0].mxu0
        %v1819 = vadd.f32 %v1449, %v1818
        %v1820 = vpop.f32.mrb[0].mxu0
        %v1821 = vadd.f32 %v1445, %v1820
        %v1822 = vpop.f32.mrb[0].mxu0
        %v1823 = vadd.f32 %v1449, %v1822
        %1824 = vmatprep.mubr.bf16.mxu0 %v1381
        %1825 = vmatmul.mubr.bf16.gmra.mrb[0].mxu0 %v1380
        %v1826 = vpop.f32.mrb[0].mxu0
        %v1827 = vadd.f32 %v1445, %v1826
        %v1828 = vpop.f32.mrb[0].mxu0
        %v1829 = vadd.f32 %v1449, %v1828
        %v1830 = vpop.f32.mrb[0].mxu0
        %v1831 = vadd.f32 %v1445, %v1830
        %v1832 = vpop.f32.mrb[0].mxu0
        %v1833 = vadd.f32 %v1449, %v1832
        %1834 = vmatprep.mubr.bf16.mxu0 %v1383
        %1835 = vmatmul.mubr.bf16.gmra.mrb[0].mxu0 %v1382
        %v1836 = vpop.f32.mrb[0].mxu0
        %v1837 = vadd.f32 %v1445, %v1836
        %v1838 = vpop.f32.mrb[0].mxu0
        %v1839 = vadd.f32 %v1449, %v1838
        %v1840 = vpop.f32.mrb[0].mxu0
        %v1841 = vadd.f32 %v1445, %v1840
        %v1842 = vpop.f32.mrb[0].mxu0
        %v1843 = vadd.f32 %v1449, %v1842
        %1844 = vmatprep.mubr.bf16.mxu0 %v1385
        %1845 = vmatmul.mubr.bf16.gmra.mrb[0].mxu0 %v1384
        %v1846 = vpop.f32.mrb[0].mxu0
        %v1847 = vadd.f32 %v1445, %v1846
        %v1848 = vpop.f32.mrb[0].mxu0
        %v1849 = vadd.f32 %v1449, %v1848
        %v1850 = vpop.f32.mrb[0].mxu0
        %v1851 = vadd.f32 %v1445, %v1850
        %v1852 = vpop.f32.mrb[0].mxu0
        %v1853 = vadd.f32 %v1449, %v1852
        %1854 = vmatprep.mubr.bf16.mxu0 %v1387
        %1855 = vmatmul.mubr.bf16.gmra.mrb[0].mxu0 %v1386
        %v1856 = vpop.f32.mrb[0].mxu0
        %v1857 = vadd.f32 %v1445, %v1856
        %v1858 = vpop.f32.mrb[0].mxu0
        %v1859 = vadd.f32 %v1449, %v1858
        %v1860 = vpop.f32.mrb[0].mxu0
        %v1861 = vadd.f32 %v1445, %v1860
        %v1862 = vpop.f32.mrb[0].mxu0
        %v1863 = vadd.f32 %v1449, %v1862
        %1864 = vmatprep.mubr.bf16.mxu0 %v1389
        %1865 = vmatmul.mubr.bf16.gmra.mrb[0].mxu0 %v1388
        %v1866 = vpop.f32.mrb[0].mxu0
        %v1867 = vadd.f32 %v1445, %v1866
        %v1868 = vpop.f32.mrb[0].mxu0
        %v1869 = vadd.f32 %v1449, %v1868
        %v1870 = vpop.f32.mrb[0].mxu0
        %v1871 = vadd.f32 %v1445, %v1870
        %v1872 = vpop.f32.mrb[0].mxu0
        %v1873 = vadd.f32 %v1449, %v1872
        %1874 = vmatprep.mubr.bf16.mxu0 %v1391
        %1875 = vmatmul.mubr.bf16.gmra.mrb[0].mxu0 %v1390
        %v1876 = vpop.f32.mrb[0].mxu0
        %v1877 = vadd.f32 %v1445, %v1876
        %v1878 = vpop.f32.mrb[0].mxu0
        %v1879 = vadd.f32 %v1449, %v1878
        %v1880 = vpop.f32.mrb[0].mxu0
        %v1881 = vadd.f32 %v1445, %v1880
        %v1882 = vpop.f32.mrb[0].mxu0
        %v1883 = vadd.f32 %v1449, %v1882
        %1884 = vmatprep.mubr.bf16.mxu0 %v1393
        %1885 = vmatmul.mubr.bf16.gmra.mrb[0].mxu0 %v1392
        %v1886 = vpop.f32.mrb[0].mxu0
        %v1887 = vadd.f32 %v1445, %v1886
        %v1888 = vpop.f32.mrb[0].mxu0
        %v1889 = vadd.f32 %v1449, %v1888
        %v1890 = vpop.f32.mrb[0].mxu0
        %v1891 = vadd.f32 %v1445, %v1890
        %v1892 = vpop.f32.mrb[0].mxu0
        %v1893 = vadd.f32 %v1449, %v1892
        %1894 = vmatprep.mubr.bf16.mxu0 %v1395
        %1895 = vmatmul.mubr.bf16.gmra.mrb[0].mxu0 %v1394
        %v1896 = vpop.f32.mrb[0].mxu0
        %v1897 = vadd.f32 %v1445, %v1896
        %v1898 = vpop.f32.mrb[0].mxu0
        %v1899 = vadd.f32 %v1449, %v1898
        %v1900 = vpop.f32.mrb[0].mxu0
        %v1901 = vadd.f32 %v1445, %v1900
        %v1902 = vpop.f32.mrb[0].mxu0
        %v1903 = vadd.f32 %v1449, %v1902
        %1904 = vmatprep.mubr.bf16.mxu0 %v1397
        %1905 = vmatmul.mubr.bf16.gmra.mrb[0].mxu0 %v1396
        %v1906 = vpop.f32.mrb[0].mxu0
        %v1907 = vadd.f32 %v1445, %v1906
        %v1908 = vpop.f32.mrb[0].mxu0
        %v1909 = vadd.f32 %v1449, %v1908
        %v1910 = vpop.f32.mrb[0].mxu0
        %v1911 = vadd.f32 %v1445, %v1910
        %v1912 = vpop.f32.mrb[0].mxu0
        %v1913 = vadd.f32 %v1449, %v1912
        %1914 = vmatprep.mubr.bf16.mxu0 %v1399
        %1915 = vmatmul.mubr.bf16.gmra.mrb[0].mxu0 %v1398
        %v1916 = vpop.f32.mrb[0].mxu0
        %v1917 = vadd.f32 %v1445, %v1916
        %v1918 = vpop.f32.mrb[0].mxu0
        %v1919 = vadd.f32 %v1449, %v1918
        %v1920 = vpop.f32.mrb[0].mxu0
        %v1921 = vadd.f32 %v1445, %v1920
        %v1922 = vpop.f32.mrb[0].mxu0
        %v1923 = vadd.f32 %v1449, %v1922
        %1924 = vmatprep.mubr.bf16.mxu0 %v1401
        %1925 = vmatmul.mubr.bf16.gmra.mrb[0].mxu0 %v1400
        %v1926 = vpop.f32.mrb[0].mxu0
        %v1927 = vadd.f32 %v1445, %v1926
        %v1928 = vpop.f32.mrb[0].mxu0
        %v1929 = vadd.f32 %v1449, %v1928
        %v1930 = vpop.f32.mrb[0].mxu0
        %v1931 = vadd.f32 %v1445, %v1930
        %v1932 = vpop.f32.mrb[0].mxu0
        %v1933 = vadd.f32 %v1449, %v1932
        %1934 = vmatprep.mubr.bf16.mxu0 %v1403
        %1935 = vmatmul.mubr.bf16.gmra.mrb[0].mxu0 %v1402
        %v1936 = vpop.f32.mrb[0].mxu0
        %v1937 = vadd.f32 %v1445, %v1936
        %v1938 = vpop.f32.mrb[0].mxu0
        %v1939 = vadd.f32 %v1449, %v1938
        %v1940 = vpop.f32.mrb[0].mxu0
        %v1941 = vadd.f32 %v1445, %v1940
        %v1942 = vpop.f32.mrb[0].mxu0
        %v1943 = vadd.f32 %v1449, %v1942
        %1944 = vmatprep.mubr.bf16.mxu0 %v1405
        %1945 = vmatmul.mubr.bf16.gmra.mrb[0].mxu0 %v1404
        %v1946 = vpop.f32.mrb[0].mxu0
        %v1947 = vadd.f32 %v1445, %v1946
        %v1948 = vpop.f32.mrb[0].mxu0
        %v1949 = vadd.f32 %v1449, %v1948
        %v1950 = vpop.f32.mrb[0].mxu0
        %v1951 = vadd.f32 %v1445, %v1950
        %v1952 = vpop.f32.mrb[0].mxu0
        %v1953 = vadd.f32 %v1449, %v1952
        %1954 = vmatprep.mubr.bf16.mxu0 %v1407
        %1955 = vmatmul.mubr.bf16.gmra.mrb[0].mxu0 %v1406
        %v1956 = vpop.f32.mrb[0].mxu0
        %v1957 = vadd.f32 %v1445, %v1956
        %v1958 = vpop.f32.mrb[0].mxu0
        %v1959 = vadd.f32 %v1449, %v1958
        %v1960 = vpop.f32.mrb[0].mxu0
        %v1961 = vadd.f32 %v1445, %v1960
        %v1962 = vpop.f32.mrb[0].mxu0
        %v1963 = vadd.f32 %v1449, %v1962
        %1964 = vdwg.mxu0
        %v1965 = vmax.f32 %v1647, 0.0
        %v1966 = vmax.f32 %v1649, 0.0
        %v1967 = vmax.f32 %v1651, 0.0
        %v1968 = vmax.f32 %v1653, 0.0
        %v1969 = vmax.f32 %v1657, 0.0
        %v1970 = vmax.f32 %v1659, 0.0
        %v1971 = vmax.f32 %v1661, 0.0
        %v1972 = vmax.f32 %v1663, 0.0
        %v1973 = vmax.f32 %v1667, 0.0
        %v1974 = vmax.f32 %v1669, 0.0
        %v1975 = vmax.f32 %v1671, 0.0
        %v1976 = vmax.f32 %v1673, 0.0
        %v1977 = vmax.f32 %v1677, 0.0
        %v1978 = vmax.f32 %v1679, 0.0
        %v1979 = vmax.f32 %v1681, 0.0
        %v1980 = vmax.f32 %v1683, 0.0
        %v1981 = vmax.f32 %v1687, 0.0
        %v1982 = vmax.f32 %v1689, 0.0
        %v1983 = vmax.f32 %v1691, 0.0
        %v1984 = vmax.f32 %v1693, 0.0
        %v1985 = vmax.f32 %v1697, 0.0
        %v1986 = vmax.f32 %v1699, 0.0
        %v1987 = vmax.f32 %v1701, 0.0
        %v1988 = vmax.f32 %v1703, 0.0
        %v1989 = vmax.f32 %v1707, 0.0
        %v1990 = vmax.f32 %v1709, 0.0
        %v1991 = vmax.f32 %v1711, 0.0
        %v1992 = vmax.f32 %v1713, 0.0
        %v1993 = vmax.f32 %v1717, 0.0
        %v1994 = vmax.f32 %v1719, 0.0
        %v1995 = vmax.f32 %v1721, 0.0
        %v1996 = vmax.f32 %v1723, 0.0
        %v1997 = vmax.f32 %v1727, 0.0
        %v1998 = vmax.f32 %v1729, 0.0
        %v1999 = vmax.f32 %v1731, 0.0
        %v2000 = vmax.f32 %v1733, 0.0
        %v2001 = vmax.f32 %v1737, 0.0
        %v2002 = vmax.f32 %v1739, 0.0
        %v2003 = vmax.f32 %v1741, 0.0
        %v2004 = vmax.f32 %v1743, 0.0
        %v2005 = vmax.f32 %v1747, 0.0
        %v2006 = vmax.f32 %v1749, 0.0
        %v2007 = vmax.f32 %v1751, 0.0
        %v2008 = vmax.f32 %v1753, 0.0
        %v2009 = vmax.f32 %v1757, 0.0
        %v2010 = vmax.f32 %v1759, 0.0
        %v2011 = vmax.f32 %v1761, 0.0
        %v2012 = vmax.f32 %v1763, 0.0
        %v2013 = vmax.f32 %v1767, 0.0
        %v2014 = vmax.f32 %v1769, 0.0
        %v2015 = vmax.f32 %v1771, 0.0
        %v2016 = vmax.f32 %v1773, 0.0
        %v2017 = vmax.f32 %v1777, 0.0
        %v2018 = vmax.f32 %v1779, 0.0
        %v2019 = vmax.f32 %v1781, 0.0
        %v2020 = vmax.f32 %v1783, 0.0
        %v2021 = vmax.f32 %v1787, 0.0
        %v2022 = vmax.f32 %v1789, 0.0
        %v2023 = vmax.f32 %v1791, 0.0
        %v2024 = vmax.f32 %v1793, 0.0
        %v2025 = vmax.f32 %v1797, 0.0
        %v2026 = vmax.f32 %v1799, 0.0
        %v2027 = vmax.f32 %v1801, 0.0
        %v2028 = vmax.f32 %v1803, 0.0
        %v2029 = vmax.f32 %v1807, 0.0
        %v2030 = vmax.f32 %v1809, 0.0
        %v2031 = vmax.f32 %v1811, 0.0
        %v2032 = vmax.f32 %v1813, 0.0
        %v2033 = vmax.f32 %v1817, 0.0
        %v2034 = vmax.f32 %v1819, 0.0
        %v2035 = vmax.f32 %v1821, 0.0
        %v2036 = vmax.f32 %v1823, 0.0
        %v2037 = vmax.f32 %v1827, 0.0
        %v2038 = vmax.f32 %v1829, 0.0
        %v2039 = vmax.f32 %v1831, 0.0
        %v2040 = vmax.f32 %v1833, 0.0
        %v2041 = vmax.f32 %v1837, 0.0
        %v2042 = vmax.f32 %v1839, 0.0
        %v2043 = vmax.f32 %v1841, 0.0
        %v2044 = vmax.f32 %v1843, 0.0
        %v2045 = vmax.f32 %v1847, 0.0
        %v2046 = vmax.f32 %v1849, 0.0
        %v2047 = vmax.f32 %v1851, 0.0
        %v2048 = vmax.f32 %v1853, 0.0
        %v2049 = vmax.f32 %v1857, 0.0
        %v2050 = vmax.f32 %v1859, 0.0
        %v2051 = vmax.f32 %v1861, 0.0
        %v2052 = vmax.f32 %v1863, 0.0
        %v2053 = vmax.f32 %v1867, 0.0
        %v2054 = vmax.f32 %v1869, 0.0
        %v2055 = vmax.f32 %v1871, 0.0
        %v2056 = vmax.f32 %v1873, 0.0
        %v2057 = vmax.f32 %v1877, 0.0
        %v2058 = vmax.f32 %v1879, 0.0
        %v2059 = vmax.f32 %v1881, 0.0
        %v2060 = vmax.f32 %v1883, 0.0
        %v2061 = vmax.f32 %v1887, 0.0
        %v2062 = vmax.f32 %v1889, 0.0
        %v2063 = vmax.f32 %v1891, 0.0
        %v2064 = vmax.f32 %v1893, 0.0
        %v2065 = vmax.f32 %v1897, 0.0
        %v2066 = vmax.f32 %v1899, 0.0
        %v2067 = vmax.f32 %v1901, 0.0
        %v2068 = vmax.f32 %v1903, 0.0
        %v2069 = vmax.f32 %v1907, 0.0
        %v2070 = vmax.f32 %v1909, 0.0
        %v2071 = vmax.f32 %v1911, 0.0
        %v2072 = vmax.f32 %v1913, 0.0
        %v2073 = vmax.f32 %v1917, 0.0
        %v2074 = vmax.f32 %v1919, 0.0
        %v2075 = vmax.f32 %v1921, 0.0
        %v2076 = vmax.f32 %v1923, 0.0
        %v2077 = vmax.f32 %v1927, 0.0
        %v2078 = vmax.f32 %v1929, 0.0
        %v2079 = vmax.f32 %v1931, 0.0
        %v2080 = vmax.f32 %v1933, 0.0
        %v2081 = vmax.f32 %v1937, 0.0
        %v2082 = vmax.f32 %v1939, 0.0
        %v2083 = vmax.f32 %v1941, 0.0
        %v2084 = vmax.f32 %v1943, 0.0
        %v2085 = vmax.f32 %v1947, 0.0
        %v2086 = vmax.f32 %v1949, 0.0
        %v2087 = vmax.f32 %v1951, 0.0
        %v2088 = vmax.f32 %v1953, 0.0
        %v2089 = vmax.f32 %v1957, 0.0
        %v2090 = vmax.f32 %v1959, 0.0
        %v2091 = vmax.f32 %v1961, 0.0
        %v2092 = vmax.f32 %v1963, 0.0
        %v2093 = vpack.c.bf16 %v1967, %v1965
        %v2094 = vpack.c.bf16 %v1968, %v1966
        %v2095 = vpack.c.bf16 %v1971, %v1969
        %v2096 = vpack.c.bf16 %v1972, %v1970
        %v2097 = vpack.c.bf16 %v1975, %v1973
        %v2098 = vpack.c.bf16 %v1976, %v1974
        %v2099 = vpack.c.bf16 %v1979, %v1977
        %v2100 = vpack.c.bf16 %v1980, %v1978
        %v2101 = vpack.c.bf16 %v1983, %v1981
        %v2102 = vpack.c.bf16 %v1984, %v1982
        %v2103 = vpack.c.bf16 %v1987, %v1985
        %v2104 = vpack.c.bf16 %v1988, %v1986
        %v2105 = vpack.c.bf16 %v1991, %v1989
        %v2106 = vpack.c.bf16 %v1992, %v1990
        %v2107 = vpack.c.bf16 %v1995, %v1993
        %v2108 = vpack.c.bf16 %v1996, %v1994
        %v2109 = vpack.c.bf16 %v1999, %v1997
        %v2110 = vpack.c.bf16 %v2000, %v1998
        %v2111 = vpack.c.bf16 %v2003, %v2001
        %v2112 = vpack.c.bf16 %v2004, %v2002
        %v2113 = vpack.c.bf16 %v2007, %v2005
        %v2114 = vpack.c.bf16 %v2008, %v2006
        %v2115 = vpack.c.bf16 %v2011, %v2009
        %v2116 = vpack.c.bf16 %v2012, %v2010
        %v2117 = vpack.c.bf16 %v2015, %v2013
        %v2118 = vpack.c.bf16 %v2016, %v2014
        %v2119 = vpack.c.bf16 %v2019, %v2017
        %v2120 = vpack.c.bf16 %v2020, %v2018
        %v2121 = vpack.c.bf16 %v2023, %v2021
        %v2122 = vpack.c.bf16 %v2024, %v2022
        %v2123 = vpack.c.bf16 %v2027, %v2025
        %v2124 = vpack.c.bf16 %v2028, %v2026
        %v2125 = vpack.c.bf16 %v2031, %v2029
        %v2126 = vpack.c.bf16 %v2032, %v2030
        %v2127 = vpack.c.bf16 %v2035, %v2033
        %v2128 = vpack.c.bf16 %v2036, %v2034
        %v2129 = vpack.c.bf16 %v2039, %v2037
        %v2130 = vpack.c.bf16 %v2040, %v2038
        %v2131 = vpack.c.bf16 %v2043, %v2041
        %v2132 = vpack.c.bf16 %v2044, %v2042
        %v2133 = vpack.c.bf16 %v2047, %v2045
        %v2134 = vpack.c.bf16 %v2048, %v2046
        %v2135 = vpack.c.bf16 %v2051, %v2049
        %v2136 = vpack.c.bf16 %v2052, %v2050
        %v2137 = vpack.c.bf16 %v2055, %v2053
        %v2138 = vpack.c.bf16 %v2056, %v2054
        %v2139 = vpack.c.bf16 %v2059, %v2057
        %v2140 = vpack.c.bf16 %v2060, %v2058
        %v2141 = vpack.c.bf16 %v2063, %v2061
        %v2142 = vpack.c.bf16 %v2064, %v2062
        %v2143 = vpack.c.bf16 %v2067, %v2065
        %v2144 = vpack.c.bf16 %v2068, %v2066
        %v2145 = vpack.c.bf16 %v2071, %v2069
        %v2146 = vpack.c.bf16 %v2072, %v2070
        %v2147 = vpack.c.bf16 %v2075, %v2073
        %v2148 = vpack.c.bf16 %v2076, %v2074
        %v2149 = vpack.c.bf16 %v2079, %v2077
        %v2150 = vpack.c.bf16 %v2080, %v2078
        %v2151 = vpack.c.bf16 %v2083, %v2081
        %v2152 = vpack.c.bf16 %v2084, %v2082
        %v2153 = vpack.c.bf16 %v2087, %v2085
        %v2154 = vpack.c.bf16 %v2088, %v2086
        %v2155 = vpack.c.bf16 %v2091, %v2089
        %v2156 = vpack.c.bf16 %v2092, %v2090
        %v2221 = vunpack.c.l.b16 %v2093
        %v2222 = vunpack.c.l.b16 %v2094
        %v2223 = vunpack.c.h.b16 %v2093
        %v2224 = vunpack.c.h.b16 %v2094
        %v2225 = vunpack.c.l.b16 %v2095
        %v2226 = vunpack.c.l.b16 %v2096
        %v2227 = vunpack.c.h.b16 %v2095
        %v2228 = vunpack.c.h.b16 %v2096
        %v2229 = vunpack.c.l.b16 %v2097
        %v2230 = vunpack.c.l.b16 %v2098
        %v2231 = vunpack.c.h.b16 %v2097
        %v2232 = vunpack.c.h.b16 %v2098
        %v2233 = vunpack.c.l.b16 %v2099
        %v2234 = vunpack.c.l.b16 %v2100
        %v2235 = vunpack.c.h.b16 %v2099
        %v2236 = vunpack.c.h.b16 %v2100
        %v2237 = vunpack.c.l.b16 %v2101
        %v2238 = vunpack.c.l.b16 %v2102
        %v2239 = vunpack.c.h.b16 %v2101
        %v2240 = vunpack.c.h.b16 %v2102
        %v2241 = vunpack.c.l.b16 %v2103
        %v2242 = vunpack.c.l.b16 %v2104
        %v2243 = vunpack.c.h.b16 %v2103
        %v2244 = vunpack.c.h.b16 %v2104
        %v2245 = vunpack.c.l.b16 %v2105
        %v2246 = vunpack.c.l.b16 %v2106
        %v2247 = vunpack.c.h.b16 %v2105
        %v2248 = vunpack.c.h.b16 %v2106
        %v2249 = vunpack.c.l.b16 %v2107
        %v2250 = vunpack.c.l.b16 %v2108
        %v2251 = vunpack.c.h.b16 %v2107
        %v2252 = vunpack.c.h.b16 %v2108
        %v2253 = vunpack.c.l.b16 %v2109
        %v2254 = vunpack.c.l.b16 %v2110
        %v2255 = vunpack.c.h.b16 %v2109
        %v2256 = vunpack.c.h.b16 %v2110
        %v2257 = vunpack.c.l.b16 %v2111
        %v2258 = vunpack.c.l.b16 %v2112
        %v2259 = vunpack.c.h.b16 %v2111
        %v2260 = vunpack.c.h.b16 %v2112
        %v2261 = vunpack.c.l.b16 %v2113
        %v2262 = vunpack.c.l.b16 %v2114
        %v2263 = vunpack.c.h.b16 %v2113
        %v2264 = vunpack.c.h.b16 %v2114
        %v2265 = vunpack.c.l.b16 %v2115
        %v2266 = vunpack.c.l.b16 %v2116
        %v2267 = vunpack.c.h.b16 %v2115
        %v2268 = vunpack.c.h.b16 %v2116
        %v2269 = vunpack.c.l.b16 %v2117
        %v2270 = vunpack.c.l.b16 %v2118
        %v2271 = vunpack.c.h.b16 %v2117
        %v2272 = vunpack.c.h.b16 %v2118
        %v2273 = vunpack.c.l.b16 %v2119
        %v2274 = vunpack.c.l.b16 %v2120
        %v2275 = vunpack.c.h.b16 %v2119
        %v2276 = vunpack.c.h.b16 %v2120
        %v2277 = vunpack.c.l.b16 %v2121
        %v2278 = vunpack.c.l.b16 %v2122
        %v2279 = vunpack.c.h.b16 %v2121
        %v2280 = vunpack.c.h.b16 %v2122
        %v2281 = vunpack.c.l.b16 %v2123
        %v2282 = vunpack.c.l.b16 %v2124
        %v2283 = vunpack.c.h.b16 %v2123
        %v2284 = vunpack.c.h.b16 %v2124
        %v2285 = vunpack.c.l.b16 %v2125
        %v2286 = vunpack.c.l.b16 %v2126
        %v2287 = vunpack.c.h.b16 %v2125
        %v2288 = vunpack.c.h.b16 %v2126
        %v2289 = vunpack.c.l.b16 %v2127
        %v2290 = vunpack.c.l.b16 %v2128
        %v2291 = vunpack.c.h.b16 %v2127
        %v2292 = vunpack.c.h.b16 %v2128
        %v2293 = vunpack.c.l.b16 %v2129
        %v2294 = vunpack.c.l.b16 %v2130
        %v2295 = vunpack.c.h.b16 %v2129
        %v2296 = vunpack.c.h.b16 %v2130
        %v2297 = vunpack.c.l.b16 %v2131
        %v2298 = vunpack.c.l.b16 %v2132
        %v2299 = vunpack.c.h.b16 %v2131
        %v2300 = vunpack.c.h.b16 %v2132
        %v2301 = vunpack.c.l.b16 %v2133
        %v2302 = vunpack.c.l.b16 %v2134
        %v2303 = vunpack.c.h.b16 %v2133
        %v2304 = vunpack.c.h.b16 %v2134
        %v2305 = vunpack.c.l.b16 %v2135
        %v2306 = vunpack.c.l.b16 %v2136
        %v2307 = vunpack.c.h.b16 %v2135
        %v2308 = vunpack.c.h.b16 %v2136
        %v2309 = vunpack.c.l.b16 %v2137
        %v2310 = vunpack.c.l.b16 %v2138
        %v2311 = vunpack.c.h.b16 %v2137
        %v2312 = vunpack.c.h.b16 %v2138
        %v2313 = vunpack.c.l.b16 %v2139
        %v2314 = vunpack.c.l.b16 %v2140
        %v2315 = vunpack.c.h.b16 %v2139
        %v2316 = vunpack.c.h.b16 %v2140
        %v2317 = vunpack.c.l.b16 %v2141
        %v2318 = vunpack.c.l.b16 %v2142
        %v2319 = vunpack.c.h.b16 %v2141
        %v2320 = vunpack.c.h.b16 %v2142
        %v2321 = vunpack.c.l.b16 %v2143
        %v2322 = vunpack.c.l.b16 %v2144
        %v2323 = vunpack.c.h.b16 %v2143
        %v2324 = vunpack.c.h.b16 %v2144
        %v2325 = vunpack.c.l.b16 %v2145
        %v2326 = vunpack.c.l.b16 %v2146
        %v2327 = vunpack.c.h.b16 %v2145
        %v2328 = vunpack.c.h.b16 %v2146
        %v2329 = vunpack.c.l.b16 %v2147
        %v2330 = vunpack.c.l.b16 %v2148
        %v2331 = vunpack.c.h.b16 %v2147
        %v2332 = vunpack.c.h.b16 %v2148
        %v2333 = vunpack.c.l.b16 %v2149
        %v2334 = vunpack.c.l.b16 %v2150
        %v2335 = vunpack.c.h.b16 %v2149
        %v2336 = vunpack.c.h.b16 %v2150
        %v2337 = vunpack.c.l.b16 %v2151
        %v2338 = vunpack.c.l.b16 %v2152
        %v2339 = vunpack.c.h.b16 %v2151
        %v2340 = vunpack.c.h.b16 %v2152
        %v2341 = vunpack.c.l.b16 %v2153
        %v2342 = vunpack.c.l.b16 %v2154
        %v2343 = vunpack.c.h.b16 %v2153
        %v2344 = vunpack.c.h.b16 %v2154
        %v2345 = vunpack.c.l.b16 %v2155
        %v2346 = vunpack.c.l.b16 %v2156
        %v2347 = vunpack.c.h.b16 %v2155
        %v2348 = vunpack.c.h.b16 %v2156
        %v2349 = vpack.c.b16 %v2222, %v2221
        %v2350 = vpack.c.b16 %v2224, %v2223
        %v2351 = vpack.c.b16 %v2226, %v2225
        %v2352 = vpack.c.b16 %v2228, %v2227
        %v2353 = vpack.c.b16 %v2230, %v2229
        %v2354 = vpack.c.b16 %v2232, %v2231
        %v2355 = vpack.c.b16 %v2234, %v2233
        %v2356 = vpack.c.b16 %v2236, %v2235
        %v2357 = vpack.c.b16 %v2238, %v2237
        %v2358 = vpack.c.b16 %v2240, %v2239
        %v2359 = vpack.c.b16 %v2242, %v2241
        %v2360 = vpack.c.b16 %v2244, %v2243
        %v2361 = vpack.c.b16 %v2246, %v2245
        %v2362 = vpack.c.b16 %v2248, %v2247
        %v2363 = vpack.c.b16 %v2250, %v2249
        %v2364 = vpack.c.b16 %v2252, %v2251
        %v2365 = vpack.c.b16 %v2254, %v2253
        %v2366 = vpack.c.b16 %v2256, %v2255
        %v2367 = vpack.c.b16 %v2258, %v2257
        %v2368 = vpack.c.b16 %v2260, %v2259
        %v2369 = vpack.c.b16 %v2262, %v2261
        %v2370 = vpack.c.b16 %v2264, %v2263
        %v2371 = vpack.c.b16 %v2266, %v2265
        %v2372 = vpack.c.b16 %v2268, %v2267
        %v2373 = vpack.c.b16 %v2270, %v2269
        %v2374 = vpack.c.b16 %v2272, %v2271
        %v2375 = vpack.c.b16 %v2274, %v2273
        %v2376 = vpack.c.b16 %v2276, %v2275
        %v2377 = vpack.c.b16 %v2278, %v2277
        %v2378 = vpack.c.b16 %v2280, %v2279
        %v2379 = vpack.c.b16 %v2282, %v2281
        %v2380 = vpack.c.b16 %v2284, %v2283
        %v2381 = vpack.c.b16 %v2286, %v2285
        %v2382 = vpack.c.b16 %v2288, %v2287
        %v2383 = vpack.c.b16 %v2290, %v2289
        %v2384 = vpack.c.b16 %v2292, %v2291
        %v2385 = vpack.c.b16 %v2294, %v2293
        %v2386 = vpack.c.b16 %v2296, %v2295
        %v2387 = vpack.c.b16 %v2298, %v2297
        %v2388 = vpack.c.b16 %v2300, %v2299
        %v2389 = vpack.c.b16 %v2302, %v2301
        %v2390 = vpack.c.b16 %v2304, %v2303
        %v2391 = vpack.c.b16 %v2306, %v2305
        %v2392 = vpack.c.b16 %v2308, %v2307
        %v2393 = vpack.c.b16 %v2310, %v2309
        %v2394 = vpack.c.b16 %v2312, %v2311
        %v2395 = vpack.c.b16 %v2314, %v2313
        %v2396 = vpack.c.b16 %v2316, %v2315
        %v2397 = vpack.c.b16 %v2318, %v2317
        %v2398 = vpack.c.b16 %v2320, %v2319
        %v2399 = vpack.c.b16 %v2322, %v2321
        %v2400 = vpack.c.b16 %v2324, %v2323
        %v2401 = vpack.c.b16 %v2326, %v2325
        %v2402 = vpack.c.b16 %v2328, %v2327
        %v2403 = vpack.c.b16 %v2330, %v2329
        %v2404 = vpack.c.b16 %v2332, %v2331
        %v2405 = vpack.c.b16 %v2334, %v2333
        %v2406 = vpack.c.b16 %v2336, %v2335
        %v2407 = vpack.c.b16 %v2338, %v2337
        %v2408 = vpack.c.b16 %v2340, %v2339
        %v2409 = vpack.c.b16 %v2342, %v2341
        %v2410 = vpack.c.b16 %v2344, %v2343
        %v2411 = vpack.c.b16 %v2346, %v2345
        %v2412 = vpack.c.b16 %v2348, %v2347
        %2477 = vst [vmem:[%s272] sm:$0xff] %v2349
        %2478 = vst [vmem:[%s272 + $0x8] sm:$0xff] %v2350
        %2479 = vst [vmem:[%s272 + $0x10] sm:$0xff] %v2351
        %2480 = vst [vmem:[%s272 + $0x18] sm:$0xff] %v2352
        %2481 = vst [vmem:[%s272 + $0x20] sm:$0xff] %v2353
        %2482 = vst [vmem:[%s272 + $0x28] sm:$0xff] %v2354
        %2483 = vst [vmem:[%s272 + $0x30] sm:$0xff] %v2355
        %2484 = vst [vmem:[%s272 + $0x38] sm:$0xff] %v2356
        %2485 = vst [vmem:[%s272 + $0x40] sm:$0xff] %v2357
        %2486 = vst [vmem:[%s272 + $0x48] sm:$0xff] %v2358
        %2487 = vst [vmem:[%s272 + $0x50] sm:$0xff] %v2359
        %2488 = vst [vmem:[%s272 + $0x58] sm:$0xff] %v2360
        %2489 = vst [vmem:[%s272 + $0x60] sm:$0xff] %v2361
        %2490 = vst [vmem:[%s272 + $0x68] sm:$0xff] %v2362
        %2491 = vst [vmem:[%s272 + $0x70] sm:$0xff] %v2363
        %2492 = vst [vmem:[%s272 + $0x78] sm:$0xff] %v2364
        %2493 = vst [vmem:[%s272 + $0x80] sm:$0xff] %v2365
        %2494 = vst [vmem:[%s272 + $0x88] sm:$0xff] %v2366
        %2495 = vst [vmem:[%s272 + $0x90] sm:$0xff] %v2367
        %2496 = vst [vmem:[%s272 + $0x98] sm:$0xff] %v2368
        %2497 = vst [vmem:[%s272 + $0xa0] sm:$0xff] %v2369
        %2498 = vst [vmem:[%s272 + $0xa8] sm:$0xff] %v2370
        %2499 = vst [vmem:[%s272 + $0xb0] sm:$0xff] %v2371
        %2500 = vst [vmem:[%s272 + $0xb8] sm:$0xff] %v2372
        %2501 = vst [vmem:[%s272 + $0xc0] sm:$0xff] %v2373
        %2502 = vst [vmem:[%s272 + $0xc8] sm:$0xff] %v2374
        %2503 = vst [vmem:[%s272 + $0xd0] sm:$0xff] %v2375
        %2504 = vst [vmem:[%s272 + $0xd8] sm:$0xff] %v2376
        %2505 = vst [vmem:[%s272 + $0xe0] sm:$0xff] %v2377
        %2506 = vst [vmem:[%s272 + $0xe8] sm:$0xff] %v2378
        %2507 = vst [vmem:[%s272 + $0xf0] sm:$0xff] %v2379
        %2508 = vst [vmem:[%s272 + $0xf8] sm:$0xff] %v2380
        %2509 = vst [vmem:[%s272 + $0x100] sm:$0xff] %v2381
        %2510 = vst [vmem:[%s272 + $0x108] sm:$0xff] %v2382
        %2511 = vst [vmem:[%s272 + $0x110] sm:$0xff] %v2383
        %2512 = vst [vmem:[%s272 + $0x118] sm:$0xff] %v2384
        %2513 = vst [vmem:[%s272 + $0x120] sm:$0xff] %v2385
        %2514 = vst [vmem:[%s272 + $0x128] sm:$0xff] %v2386
        %2515 = vst [vmem:[%s272 + $0x130] sm:$0xff] %v2387
        %2516 = vst [vmem:[%s272 + $0x138] sm:$0xff] %v2388
        %2517 = vst [vmem:[%s272 + $0x140] sm:$0xff] %v2389
        %2518 = vst [vmem:[%s272 + $0x148] sm:$0xff] %v2390
        %2519 = vst [vmem:[%s272 + $0x150] sm:$0xff] %v2391
        %2520 = vst [vmem:[%s272 + $0x158] sm:$0xff] %v2392
        %2521 = vst [vmem:[%s272 + $0x160] sm:$0xff] %v2393
        %2522 = vst [vmem:[%s272 + $0x168] sm:$0xff] %v2394
        %2523 = vst [vmem:[%s272 + $0x170] sm:$0xff] %v2395
        %2524 = vst [vmem:[%s272 + $0x178] sm:$0xff] %v2396
        %2525 = vst [vmem:[%s272 + $0x180] sm:$0xff] %v2397
        %2526 = vst [vmem:[%s272 + $0x188] sm:$0xff] %v2398
        %2527 = vst [vmem:[%s272 + $0x190] sm:$0xff] %v2399
        %2528 = vst [vmem:[%s272 + $0x198] sm:$0xff] %v2400
        %2529 = vst [vmem:[%s272 + $0x1a0] sm:$0xff] %v2401
        %2530 = vst [vmem:[%s272 + $0x1a8] sm:$0xff] %v2402
        %2531 = vst [vmem:[%s272 + $0x1b0] sm:$0xff] %v2403
        %2532 = vst [vmem:[%s272 + $0x1b8] sm:$0xff] %v2404
        %2533 = vst [vmem:[%s272 + $0x1c0] sm:$0xff] %v2405
        %2534 = vst [vmem:[%s272 + $0x1c8] sm:$0xff] %v2406
        %2535 = vst [vmem:[%s272 + $0x1d0] sm:$0xff] %v2407
        %2536 = vst [vmem:[%s272 + $0x1d8] sm:$0xff] %v2408
        %2537 = vst [vmem:[%s272 + $0x1e0] sm:$0xff] %v2409
        %2538 = vst [vmem:[%s272 + $0x1e8] sm:$0xff] %v2410
        %2539 = vst [vmem:[%s272 + $0x1f0] sm:$0xff] %v2411
        %2540 = vst [vmem:[%s272 + $0x1f8] sm:$0xff] %v2412
        %s2541 = sand.u32 %s141, 1
        %s2542 = scalar_lea.sflag [#allocation4], %s2541
        %s2543 = sand.u32 %s141, 1
        %s2544 = smul.addr %s2543, 512
        %s2545 = scalar_lea.vmem [#allocation8], %s2544
        // Predicated region
        $region53: #{tpu_custom_call.1} parent=39 // pred_check
          %p2546 = pneg %p151
        $region54: #{tpu_custom_call.1} parent=39 // pred_check_branch
          %2548 = sbr.rel (%p2546) target = $region56
        $region55: #{tpu_custom_call.1} parent=39 // pred_region
          %s2549 = smul.u32 64, %s23
          %s2551 = ssub.s32 8192, 8192
          %2552 = vsyncadd %s2542, %s2551
          %s2553 = smul.addr %s2549, 2
          %s2554 = smul.addr %s2553, 64
          %s2555 = scalar_lea.hbm %s5, %s2554
          %s2556 = sshll.u32 %s2545, 4
          %s2557 = int_to_ptr.vmem [resolvable:$true] %s2556
          %2562 = dma.vmem_to_hbm [thread:$0]  %s2557, 8192, %s2555, %s2542, 128, 128, 8
        $region56: #{tpu_custom_call.1} parent=39 // pred_fallthru
          _
      $region40: #{tpu_custom_call.1} parent=5 // pred_fallthru
        _
      %p2563 = scmp.le.s32.totalorder 2, %s18
      // Predicated region
      $region57: #{tpu_custom_call.1} parent=5 // pred_check
        %p2564 = pneg %p2563
      $region58: #{tpu_custom_call.1} parent=5 // pred_check_branch
        %2566 = sbr.rel (%p2564) target = $region60
      $region59: #{tpu_custom_call.1} parent=5 // pred_region
        %s2567 = ssub.s32 %s18, 2
        // Predicated region
        $region61: #{tpu_custom_call.1} parent=59 // pred_check
          %p2568 = pneg %p157
        $region62: #{tpu_custom_call.1} parent=59 // pred_check_branch
          %2570 = sbr.rel (%p2568) target = $region64
        $region63: #{tpu_custom_call.1} parent=59 // pred_region
          %s2571 = sand.u32 %s142, 1
          %s2572 = scalar_lea.sflag [#allocation4], %s2571
          %s2573 = sand.u32 %s142, 1
          %s2574 = smul.addr %s2573, 512
          %s2575 = scalar_lea.vmem [#allocation8], %s2574
          %2576 = dma.done %s2572, 8192
        $region64: #{tpu_custom_call.1} parent=59 // pred_fallthru
          _
      $region60: #{tpu_custom_call.1} parent=5 // pred_fallthru
        _
    $region6: #{tpu_custom_call.1} parent=1 // loop_footer
      %s22 = sadd.s32 1, %s18
    $region7: #{tpu_custom_call.1} parent=1 // loop_footer_branch
      %17 = sbr.rel target = $region3
    $region8: #{tpu_custom_call.1} parent=1 // loop_exit
      _
    %2577 = vsyncpa [#allocation3], 1
    %s2578 = scalar_lea.sflag [#allocation3], 1
    %2579 = vsyncpa %s2578, 1
    %2580 = vsyncpa [#allocation6], 1
    %2581 = vsyncpa [#allocation4], 1
    %s2582 = scalar_lea.sflag [#allocation4], 1
    %2583 = vsyncpa %s2582, 1

</llo_original>
